<compile_context>
chip_gen: v7x
topology: tpu7x:2x2x1
jax: 0.10.0
libtpu: 0.0.40
codegen_flags: <defaults>
</compile_context>

<pallas_src>
import numpy as np
import jax
import jax.numpy as jnp
from jax.experimental import pallas as pl
from jax.experimental.pallas import tpu as pltpu


# ------------------------------- Pallas kernel -------------------------------

def _bn_pad_kernel(x_ref, scale_ref, shift_ref, edge_ref, o_ref):
    # x_ref:     (TR, D,  H,  W )  input rows (row = one (batch, channel) pair)
    # scale_ref: (TR, 1,  1,  1 )  per-row BN scale
    # shift_ref: (TR, 1,  1,  1 )  per-row BN shift  (== pad_values)
    # edge_ref:  (1,  Dp, Hp, 1 )  1.0 on the D/H face rows of the padded volume
    # o_ref:     (TR, Dp, Hp, Wp)  padded output rows
    D, H, W = x_ref.shape[1], x_ref.shape[2], x_ref.shape[3]
    Dp = o_ref.shape[1]
    p = (Dp - D) // 2  # static Python int

    scale = scale_ref[...]
    shift = shift_ref[...]
    y = x_ref[...] * scale + shift                  # eval-mode BatchNorm3d

    if p > 0:
        # Pad pattern: pad_values on the D/H faces, zero elsewhere (incl. the
        # W-only faces, which PyTorch leaves as the F.pad zeros).
        fill = edge_ref[...] * shift                # (TR, Dp, Hp, 1)
        o_ref[...] = jnp.broadcast_to(fill, o_ref.shape)   # cheap lane broadcast
        # Overwrite the interior window with the normalized input.
        o_ref[:, p:p + D, p:p + H, p:p + W] = y
    else:
        o_ref[...] = y


# --------------------------------- wrapper -----------------------------------

def _round_up(a, m):
    return (a + m - 1) // m * m


def bn_and_pad_pallas(x, gamma, beta, running_mean, running_var,
                      *, eps=1e-5, pad_pixels=1, vmem_budget_bytes=10 << 20):
    """x: (B, C, D, H, W) float32 -> (B, C, D+2p, H+2p, W+2p) float32."""
    B, C, D, H, W = x.shape
    p = int(pad_pixels)
    Dp, Hp, Wp = D + 2 * p, H + 2 * p, W + 2 * p
    BC = B * C

    x = x.astype(jnp.float32)
    scale = (gamma / jnp.sqrt(running_var + eps)).astype(jnp.float32)
    shift = (beta - running_mean * scale).astype(jnp.float32)   # == pad_values

    # Per-(batch, channel)-row copies of the per-channel affine params, shaped so
    # the BlockSpec's last two dims equal the full array dims (no (8,128) issue).
    scale_bc = jnp.broadcast_to(scale[None, :], (B, C)).reshape(BC, 1, 1, 1)
    shift_bc = jnp.broadcast_to(shift[None, :], (B, C)).reshape(BC, 1, 1, 1)

    # D/H face indicator of the padded volume, W-narrow (tiny constant; fetched
    # once since its index_map is constant across the grid).
    edge = np.zeros((1, Dp, Hp, 1), np.float32)
    if p > 0:
        edge[:, :p, :, :] = 1.0
        edge[:, Dp - p:, :, :] = 1.0
        edge[:, :, :p, :] = 1.0
        edge[:, :, Hp - p:, :] = 1.0
    edge = jnp.asarray(edge)

    x_rows = x.reshape(BC, D, H, W)

    # Row-tile: largest divisor of B*C whose *layout-padded* (8,128) VMEM
    # footprint, double-buffered for both input and output blocks, stays within
    # the budget (safe under every chip's default scoped-VMEM limit).
    in_row_vmem = 4 * D * _round_up(H, 8) * _round_up(W, 128)
    out_row_vmem = 4 * Dp * _round_up(Hp, 8) * _round_up(Wp, 128)
    cap = max(1, int(vmem_budget_bytes) // (2 * (in_row_vmem + out_row_vmem)))
    tr = 1
    for t in range(1, BC + 1):
        if BC % t == 0 and t <= cap:
            tr = t

    flops = 2 * BC * D * H * W
    bytes_accessed = 4 * (BC * D * H * W + BC * Dp * Hp * Wp + 2 * BC + Dp * Hp)

    out = pl.pallas_call(
        _bn_pad_kernel,
        out_shape=jax.ShapeDtypeStruct((BC, Dp, Hp, Wp), jnp.float32),
        grid=(BC // tr,),
        in_specs=[
            pl.BlockSpec((tr, D, H, W), lambda i: (i, 0, 0, 0)),
            pl.BlockSpec((tr, 1, 1, 1), lambda i: (i, 0, 0, 0)),
            pl.BlockSpec((tr, 1, 1, 1), lambda i: (i, 0, 0, 0)),
            pl.BlockSpec((1, Dp, Hp, 1), lambda i: (0, 0, 0, 0)),
        ],
        out_specs=pl.BlockSpec((tr, Dp, Hp, Wp), lambda i: (i, 0, 0, 0)),
        compiler_params=pltpu.CompilerParams(
            dimension_semantics=("parallel",)),   # v7x: shard rows across both TCs
        cost_estimate=pl.CostEstimate(
            flops=flops, transcendentals=0, bytes_accessed=bytes_accessed),
    )(x_rows, scale_bc, shift_bc, edge)

    return out.reshape(B, C, Dp, Hp, Wp)


# ------------------------ pure-JAX reference (exact spec) ---------------------

def bn_and_pad_ref(x, gamma, beta, mean, var, *, eps=1e-5, pad_pixels=1):
    p = pad_pixels
    scale = gamma / jnp.sqrt(var + eps)
    shift = beta - mean * scale
    y = x * scale.reshape(1, -1, 1, 1, 1) + shift.reshape(1, -1, 1, 1, 1)
    if p == 0:
        return y
    out = jnp.pad(y, ((0, 0), (0, 0), (p, p), (p, p), (p, p)))
    pv = shift.reshape(1, -1, 1, 1, 1)
    out = out.at[:, :, 0:p, :, :].set(pv)
    out = out.at[:, :, -p:, :, :].set(pv)
    out = out.at[:, :, :, 0:p, :].set(pv)
    out = out.at[:, :, :, -p:, :].set(pv)
    # NOTE: the W-only faces are intentionally NOT assigned (matches the PyTorch
    # forward, which sets only 4 of the 6 faces), so they remain zero.
    return out


# ------------------------------------ main ------------------------------------

if __name__ == "__main__":
    key = jax.random.PRNGKey(0)
    kx, kg, kb, km, kv = jax.random.split(key, 5)

    B, C, D, H, W = 2, 8, 8, 8, 8
    PAD = 1
    EPS = 1e-5

    x = jax.random.normal(kx, (B, C, D, H, W), jnp.float32)
    gamma = jax.random.uniform(kg, (C,), jnp.float32, 0.5, 1.5)
    beta = jax.random.uniform(kb, (C,), jnp.float32, -0.5, 0.5)
    mean = jax.random.uniform(km, (C,), jnp.float32, -0.5, 0.5)
    var = jax.random.uniform(kv, (C,), jnp.float32, 0.5, 1.5)

    out = bn_and_pad_pallas(x, gamma, beta, mean, var, eps=EPS, pad_pixels=PAD)
    out = jax.block_until_ready(out)

    ref = bn_and_pad_ref(x, gamma, beta, mean, var, eps=EPS, pad_pixels=PAD)
    np.testing.assert_allclose(np.asarray(out), np.asarray(ref), rtol=1e-5, atol=1e-5)

    print("KERNEL_OK")
</pallas_src>

<mosaic_0001>
module attributes {stable_mosaic.version = 11 : i64} {
  func.func @_bn_pad_kernel(%arg0: i32, %arg1: memref<16x8x8x8xf32, #tpu.memory_space<vmem>>, %arg2: memref<16x1x1x1xf32, #tpu.memory_space<vmem>>, %arg3: memref<16x1x1x1xf32, #tpu.memory_space<vmem>>, %arg4: memref<1x10x10x1xf32, #tpu.memory_space<vmem>>, %arg5: memref<16x10x10x10xf32, #tpu.memory_space<vmem>>) attributes {dimension_semantics = [#tpu.dimension_semantics<parallel>], iteration_bounds = array<i64: 1>, scalar_prefetch = 0 : i64, scratch_operands = 0 : i64, tpu.core_type = #tpu.core_type<tc>, window_params = [{transform_indices = @transform_0, window_bounds = array<i64: 16, 8, 8, 8>}, {transform_indices = @transform_1, window_bounds = array<i64: 16, 1, 1, 1>}, {transform_indices = @transform_2, window_bounds = array<i64: 16, 1, 1, 1>}, {pipeline_mode = #tpu.pipeline_mode<synchronous>, transform_indices = @transform_3, window_bounds = array<i64: 1, 10, 10, 1>}, {transform_indices = @transform_4, window_bounds = array<i64: 16, 10, 10, 10>}]} {
    %c0 = arith.constant 0 : index
    %c0_0 = arith.constant 0 : index
    %c0_1 = arith.constant 0 : index
    %c0_2 = arith.constant 0 : index
    %0 = vector.load %arg2[%c0, %c0_0, %c0_1, %c0_2] : memref<16x1x1x1xf32, #tpu.memory_space<vmem>>, vector<16x1x1x1xf32>
    %c0_3 = arith.constant 0 : index
    %c0_4 = arith.constant 0 : index
    %c0_5 = arith.constant 0 : index
    %c0_6 = arith.constant 0 : index
    %1 = vector.load %arg3[%c0_3, %c0_4, %c0_5, %c0_6] : memref<16x1x1x1xf32, #tpu.memory_space<vmem>>, vector<16x1x1x1xf32>
    %c0_7 = arith.constant 0 : index
    %c0_8 = arith.constant 0 : index
    %c0_9 = arith.constant 0 : index
    %c0_10 = arith.constant 0 : index
    %2 = vector.load %arg1[%c0_7, %c0_8, %c0_9, %c0_10] : memref<16x8x8x8xf32, #tpu.memory_space<vmem>>, vector<16x8x8x8xf32>
    %3 = vector.broadcast %0 : vector<16x1x1x1xf32> to vector<16x8x8x8xf32>
    %4 = arith.mulf %2, %3 : vector<16x8x8x8xf32>
    %5 = vector.broadcast %1 : vector<16x1x1x1xf32> to vector<16x8x8x8xf32>
    %6 = arith.addf %4, %5 : vector<16x8x8x8xf32>
    %c0_11 = arith.constant 0 : index
    %c0_12 = arith.constant 0 : index
    %c0_13 = arith.constant 0 : index
    %c0_14 = arith.constant 0 : index
    %7 = vector.load %arg4[%c0_11, %c0_12, %c0_13, %c0_14] : memref<1x10x10x1xf32, #tpu.memory_space<vmem>>, vector<1x10x10x1xf32>
    %8 = vector.broadcast %7 : vector<1x10x10x1xf32> to vector<16x10x10x1xf32>
    %9 = vector.broadcast %1 : vector<16x1x1x1xf32> to vector<16x10x10x1xf32>
    %10 = arith.mulf %8, %9 : vector<16x10x10x1xf32>
    %11 = vector.shape_cast %10 : vector<16x10x10x1xf32> to vector<16x10x10x1xf32>
    %12 = vector.broadcast %11 : vector<16x10x10x1xf32> to vector<16x10x10x10xf32>
    %c0_15 = arith.constant 0 : index
    %c0_16 = arith.constant 0 : index
    %c0_17 = arith.constant 0 : index
    %c0_18 = arith.constant 0 : index
    %13 = vector.load %arg5[%c0_15, %c0_16, %c0_17, %c0_18] : memref<16x10x10x10xf32, #tpu.memory_space<vmem>>, vector<16x10x10x10xf32>
    tpu.vector_store %arg5[%c0_15, %c0_16, %c0_17, %c0_18], %12 {strides = array<i32>} : memref<16x10x10x10xf32, #tpu.memory_space<vmem>>, vector<16x10x10x10xf32>,
    %c0_19 = arith.constant 0 : index
    %c1 = arith.constant 1 : index
    %c1_20 = arith.constant 1 : index
    %c1_21 = arith.constant 1 : index
    %14 = vector.load %arg5[%c0_19, %c1, %c1_20, %c1_21] : memref<16x10x10x10xf32, #tpu.memory_space<vmem>>, vector<16x8x8x8xf32>
    tpu.vector_store %arg5[%c0_19, %c1, %c1_20, %c1_21], %6 {strides = array<i32>} : memref<16x10x10x10xf32, #tpu.memory_space<vmem>>, vector<16x8x8x8xf32>,
    return
  }
  func.func @transform_0(%arg0: i32) -> (i32, i32, i32, i32) {
    %c0_i32 = arith.constant 0 : i32
    %c0_i32_0 = arith.constant 0 : i32
    %c0_i32_1 = arith.constant 0 : i32
    %c0_i32_2 = arith.constant 0 : i32
    return %arg0, %c0_i32, %c0_i32_0, %c0_i32_1 : i32, i32, i32, i32
  }
  func.func @transform_1(%arg0: i32) -> (i32, i32, i32, i32) {
    %c0_i32 = arith.constant 0 : i32
    %c0_i32_0 = arith.constant 0 : i32
    %c0_i32_1 = arith.constant 0 : i32
    %c0_i32_2 = arith.constant 0 : i32
    return %arg0, %c0_i32, %c0_i32_0, %c0_i32_1 : i32, i32, i32, i32
  }
  func.func @transform_2(%arg0: i32) -> (i32, i32, i32, i32) {
    %c0_i32 = arith.constant 0 : i32
    %c0_i32_0 = arith.constant 0 : i32
    %c0_i32_1 = arith.constant 0 : i32
    %c0_i32_2 = arith.constant 0 : i32
    return %arg0, %c0_i32, %c0_i32_0, %c0_i32_1 : i32, i32, i32, i32
  }
  func.func @transform_3(%arg0: i32) -> (i32, i32, i32, i32) {
    %c0_i32 = arith.constant 0 : i32
    %c0_i32_0 = arith.constant 0 : i32
    %c0_i32_1 = arith.constant 0 : i32
    %c0_i32_2 = arith.constant 0 : i32
    %c0_i32_3 = arith.constant 0 : i32
    return %c0_i32, %c0_i32_0, %c0_i32_1, %c0_i32_2 : i32, i32, i32, i32
  }
  func.func @transform_4(%arg0: i32) -> (i32, i32, i32, i32) {
    %c0_i32 = arith.constant 0 : i32
    %c0_i32_0 = arith.constant 0 : i32
    %c0_i32_1 = arith.constant 0 : i32
    %c0_i32_2 = arith.constant 0 : i32
    return %arg0, %c0_i32, %c0_i32_0, %c0_i32_1 : i32, i32, i32, i32
  }
}

</mosaic_0001>

<llo_original>
// kernel: tpu_custom_call.1
$region0: #{tpu_custom_call.1}
  #allocation0 [shape = 'u32[]', space=smem, size = 0x4, offset = 0x4, fixed_abs, tag = 'smem constant byte address 0x4 - core index']
  #allocation1 [shape = 'u32[144,128]{1,0:T(1,128)}', space=vmem, size = 0x12000, scoped, tag = 'internal scratch']
  %s0 = inlined_call_operand.vmem [shape: f32[16,8,8,8], index: 0, kind: input, shape index: {}]
  %s1 = inlined_call_operand.vmem [shape: f32[16,1,1,1], index: 1, kind: input, shape index: {}]
  %s2 = inlined_call_operand.vmem [shape: f32[16,1,1,1], index: 2, kind: input, shape index: {}]
  %s3 = inlined_call_operand.vmem [shape: f32[1,10,10,1], index: 3, kind: input, shape index: {}]
  %s4 = inlined_call_operand.vmem [shape: f32[16,10,10,10], index: 4, kind: output, shape index: {}]
  %s5 = sld [smem:[#allocation0]]
  $region26: #{tpu_custom_call.1} parent=0
    _
  %s7 = ssub.s32 1, %s5
  %s8 = scalar_select 0, %s7, %s5
  // Predicated region
  $region2: #{tpu_custom_call.1} parent=0 // pred_check
    _
  $region3: #{tpu_custom_call.1} parent=0 // pred_check_branch
    %10 = sbr.rel (0) target = $region5
  $region4: #{tpu_custom_call.1} parent=0 // pred_region
    _
  $region5: #{tpu_custom_call.1} parent=0 // pred_fallthru
    _
  // Predicated region
  $region6: #{tpu_custom_call.1} parent=0 // pred_check
    _
  $region7: #{tpu_custom_call.1} parent=0 // pred_check_branch
    %12 = sbr.rel (0) target = $region9
  $region8: #{tpu_custom_call.1} parent=0 // pred_region
    _
  $region9: #{tpu_custom_call.1} parent=0 // pred_fallthru
    _
  // Predicated region
  $region10: #{tpu_custom_call.1} parent=0 // pred_check
    _
  $region11: #{tpu_custom_call.1} parent=0 // pred_check_branch
    %14 = sbr.rel (0) target = $region13
  $region12: #{tpu_custom_call.1} parent=0 // pred_region
    _
  $region13: #{tpu_custom_call.1} parent=0 // pred_fallthru
    _
  // Predicated region
  $region14: #{tpu_custom_call.1} parent=0 // pred_check
    _
  $region15: #{tpu_custom_call.1} parent=0 // pred_check_branch
    %16 = sbr.rel (0) target = $region17
  $region16: #{tpu_custom_call.1} parent=0 // pred_region
    _
  $region17: #{tpu_custom_call.1} parent=0 // pred_fallthru
    _
  %v17 = vld [vmem:[%s1] sm:$0x1]
  %v18 = vld [vmem:[%s1 + $0x1] sm:$0x1]
  %v19 = vld [vmem:[%s1 + $0x2] sm:$0x1]
  %v20 = vld [vmem:[%s1 + $0x3] sm:$0x1]
  %v21 = vld [vmem:[%s1 + $0x4] sm:$0x1]
  %v22 = vld [vmem:[%s1 + $0x5] sm:$0x1]
  %v23 = vld [vmem:[%s1 + $0x6] sm:$0x1]
  %v24 = vld [vmem:[%s1 + $0x7] sm:$0x1]
  %v25 = vld [vmem:[%s1 + $0x8] sm:$0x1]
  %v26 = vld [vmem:[%s1 + $0x9] sm:$0x1]
  %v27 = vld [vmem:[%s1 + $0xa] sm:$0x1]
  %v28 = vld [vmem:[%s1 + $0xb] sm:$0x1]
  %v29 = vld [vmem:[%s1 + $0xc] sm:$0x1]
  %v30 = vld [vmem:[%s1 + $0xd] sm:$0x1]
  %v31 = vld [vmem:[%s1 + $0xe] sm:$0x1]
  %v32 = vld [vmem:[%s1 + $0xf] sm:$0x1]
  %v33 = vld [vmem:[%s2] sm:$0x1]
  %v34 = vld [vmem:[%s2 + $0x1] sm:$0x1]
  %v35 = vld [vmem:[%s2 + $0x2] sm:$0x1]
  %v36 = vld [vmem:[%s2 + $0x3] sm:$0x1]
  %v37 = vld [vmem:[%s2 + $0x4] sm:$0x1]
  %v38 = vld [vmem:[%s2 + $0x5] sm:$0x1]
  %v39 = vld [vmem:[%s2 + $0x6] sm:$0x1]
  %v40 = vld [vmem:[%s2 + $0x7] sm:$0x1]
  %v41 = vld [vmem:[%s2 + $0x8] sm:$0x1]
  %v42 = vld [vmem:[%s2 + $0x9] sm:$0x1]
  %v43 = vld [vmem:[%s2 + $0xa] sm:$0x1]
  %v44 = vld [vmem:[%s2 + $0xb] sm:$0x1]
  %v45 = vld [vmem:[%s2 + $0xc] sm:$0x1]
  %v46 = vld [vmem:[%s2 + $0xd] sm:$0x1]
  %v47 = vld [vmem:[%s2 + $0xe] sm:$0x1]
  %v48 = vld [vmem:[%s2 + $0xf] sm:$0x1]
  %v49 = vld [vmem:[%s0] sm:$0xff]
  %v50 = vld [vmem:[%s0 + $0x8] sm:$0xff]
  %v51 = vld [vmem:[%s0 + $0x10] sm:$0xff]
  %v52 = vld [vmem:[%s0 + $0x18] sm:$0xff]
  %v53 = vld [vmem:[%s0 + $0x20] sm:$0xff]
  %v54 = vld [vmem:[%s0 + $0x28] sm:$0xff]
  %v55 = vld [vmem:[%s0 + $0x30] sm:$0xff]
  %v56 = vld [vmem:[%s0 + $0x38] sm:$0xff]
  %v57 = vld [vmem:[%s0 + $0x40] sm:$0xff]
  %v58 = vld [vmem:[%s0 + $0x48] sm:$0xff]
  %v59 = vld [vmem:[%s0 + $0x50] sm:$0xff]
  %v60 = vld [vmem:[%s0 + $0x58] sm:$0xff]
  %v61 = vld [vmem:[%s0 + $0x60] sm:$0xff]
  %v62 = vld [vmem:[%s0 + $0x68] sm:$0xff]
  %v63 = vld [vmem:[%s0 + $0x70] sm:$0xff]
  %v64 = vld [vmem:[%s0 + $0x78] sm:$0xff]
  %v65 = vld [vmem:[%s0 + $0x80] sm:$0xff]
  %v66 = vld [vmem:[%s0 + $0x88] sm:$0xff]
  %v67 = vld [vmem:[%s0 + $0x90] sm:$0xff]
  %v68 = vld [vmem:[%s0 + $0x98] sm:$0xff]
  %v69 = vld [vmem:[%s0 + $0xa0] sm:$0xff]
  %v70 = vld [vmem:[%s0 + $0xa8] sm:$0xff]
  %v71 = vld [vmem:[%s0 + $0xb0] sm:$0xff]
  %v72 = vld [vmem:[%s0 + $0xb8] sm:$0xff]
  %v73 = vld [vmem:[%s0 + $0xc0] sm:$0xff]
  %v74 = vld [vmem:[%s0 + $0xc8] sm:$0xff]
  %v75 = vld [vmem:[%s0 + $0xd0] sm:$0xff]
  %v76 = vld [vmem:[%s0 + $0xd8] sm:$0xff]
  %v77 = vld [vmem:[%s0 + $0xe0] sm:$0xff]
  %v78 = vld [vmem:[%s0 + $0xe8] sm:$0xff]
  %v79 = vld [vmem:[%s0 + $0xf0] sm:$0xff]
  %v80 = vld [vmem:[%s0 + $0xf8] sm:$0xff]
  %v81 = vld [vmem:[%s0 + $0x100] sm:$0xff]
  %v82 = vld [vmem:[%s0 + $0x108] sm:$0xff]
  %v83 = vld [vmem:[%s0 + $0x110] sm:$0xff]
  %v84 = vld [vmem:[%s0 + $0x118] sm:$0xff]
  %v85 = vld [vmem:[%s0 + $0x120] sm:$0xff]
  %v86 = vld [vmem:[%s0 + $0x128] sm:$0xff]
  %v87 = vld [vmem:[%s0 + $0x130] sm:$0xff]
  %v88 = vld [vmem:[%s0 + $0x138] sm:$0xff]
  %v89 = vld [vmem:[%s0 + $0x140] sm:$0xff]
  %v90 = vld [vmem:[%s0 + $0x148] sm:$0xff]
  %v91 = vld [vmem:[%s0 + $0x150] sm:$0xff]
  %v92 = vld [vmem:[%s0 + $0x158] sm:$0xff]
  %v93 = vld [vmem:[%s0 + $0x160] sm:$0xff]
  %v94 = vld [vmem:[%s0 + $0x168] sm:$0xff]
  %v95 = vld [vmem:[%s0 + $0x170] sm:$0xff]
  %v96 = vld [vmem:[%s0 + $0x178] sm:$0xff]
  %v97 = vld [vmem:[%s0 + $0x180] sm:$0xff]
  %v98 = vld [vmem:[%s0 + $0x188] sm:$0xff]
  %v99 = vld [vmem:[%s0 + $0x190] sm:$0xff]
  %v100 = vld [vmem:[%s0 + $0x198] sm:$0xff]
  %v101 = vld [vmem:[%s0 + $0x1a0] sm:$0xff]
  %v102 = vld [vmem:[%s0 + $0x1a8] sm:$0xff]
  %v103 = vld [vmem:[%s0 + $0x1b0] sm:$0xff]
  %v104 = vld [vmem:[%s0 + $0x1b8] sm:$0xff]
  %v105 = vld [vmem:[%s0 + $0x1c0] sm:$0xff]
  %v106 = vld [vmem:[%s0 + $0x1c8] sm:$0xff]
  %v107 = vld [vmem:[%s0 + $0x1d0] sm:$0xff]
  %v108 = vld [vmem:[%s0 + $0x1d8] sm:$0xff]
  %v109 = vld [vmem:[%s0 + $0x1e0] sm:$0xff]
  %v110 = vld [vmem:[%s0 + $0x1e8] sm:$0xff]
  %v111 = vld [vmem:[%s0 + $0x1f0] sm:$0xff]
  %v112 = vld [vmem:[%s0 + $0x1f8] sm:$0xff]
  %v113 = vld [vmem:[%s0 + $0x200] sm:$0xff]
  %v114 = vld [vmem:[%s0 + $0x208] sm:$0xff]
  %v115 = vld [vmem:[%s0 + $0x210] sm:$0xff]
  %v116 = vld [vmem:[%s0 + $0x218] sm:$0xff]
  %v117 = vld [vmem:[%s0 + $0x220] sm:$0xff]
  %v118 = vld [vmem:[%s0 + $0x228] sm:$0xff]
  %v119 = vld [vmem:[%s0 + $0x230] sm:$0xff]
  %v120 = vld [vmem:[%s0 + $0x238] sm:$0xff]
  %v121 = vld [vmem:[%s0 + $0x240] sm:$0xff]
  %v122 = vld [vmem:[%s0 + $0x248] sm:$0xff]
  %v123 = vld [vmem:[%s0 + $0x250] sm:$0xff]
  %v124 = vld [vmem:[%s0 + $0x258] sm:$0xff]
  %v125 = vld [vmem:[%s0 + $0x260] sm:$0xff]
  %v126 = vld [vmem:[%s0 + $0x268] sm:$0xff]
  %v127 = vld [vmem:[%s0 + $0x270] sm:$0xff]
  %v128 = vld [vmem:[%s0 + $0x278] sm:$0xff]
  %v129 = vld [vmem:[%s0 + $0x280] sm:$0xff]
  %v130 = vld [vmem:[%s0 + $0x288] sm:$0xff]
  %v131 = vld [vmem:[%s0 + $0x290] sm:$0xff]
  %v132 = vld [vmem:[%s0 + $0x298] sm:$0xff]
  %v133 = vld [vmem:[%s0 + $0x2a0] sm:$0xff]
  %v134 = vld [vmem:[%s0 + $0x2a8] sm:$0xff]
  %v135 = vld [vmem:[%s0 + $0x2b0] sm:$0xff]
  %v136 = vld [vmem:[%s0 + $0x2b8] sm:$0xff]
  %v137 = vld [vmem:[%s0 + $0x2c0] sm:$0xff]
  %v138 = vld [vmem:[%s0 + $0x2c8] sm:$0xff]
  %v139 = vld [vmem:[%s0 + $0x2d0] sm:$0xff]
  %v140 = vld [vmem:[%s0 + $0x2d8] sm:$0xff]
  %v141 = vld [vmem:[%s0 + $0x2e0] sm:$0xff]
  %v142 = vld [vmem:[%s0 + $0x2e8] sm:$0xff]
  %v143 = vld [vmem:[%s0 + $0x2f0] sm:$0xff]
  %v144 = vld [vmem:[%s0 + $0x2f8] sm:$0xff]
  %v145 = vld [vmem:[%s0 + $0x300] sm:$0xff]
  %v146 = vld [vmem:[%s0 + $0x308] sm:$0xff]
  %v147 = vld [vmem:[%s0 + $0x310] sm:$0xff]
  %v148 = vld [vmem:[%s0 + $0x318] sm:$0xff]
  %v149 = vld [vmem:[%s0 + $0x320] sm:$0xff]
  %v150 = vld [vmem:[%s0 + $0x328] sm:$0xff]
  %v151 = vld [vmem:[%s0 + $0x330] sm:$0xff]
  %v152 = vld [vmem:[%s0 + $0x338] sm:$0xff]
  %v153 = vld [vmem:[%s0 + $0x340] sm:$0xff]
  %v154 = vld [vmem:[%s0 + $0x348] sm:$0xff]
  %v155 = vld [vmem:[%s0 + $0x350] sm:$0xff]
  %v156 = vld [vmem:[%s0 + $0x358] sm:$0xff]
  %v157 = vld [vmem:[%s0 + $0x360] sm:$0xff]
  %v158 = vld [vmem:[%s0 + $0x368] sm:$0xff]
  %v159 = vld [vmem:[%s0 + $0x370] sm:$0xff]
  %v160 = vld [vmem:[%s0 + $0x378] sm:$0xff]
  %v161 = vld [vmem:[%s0 + $0x380] sm:$0xff]
  %v162 = vld [vmem:[%s0 + $0x388] sm:$0xff]
  %v163 = vld [vmem:[%s0 + $0x390] sm:$0xff]
  %v164 = vld [vmem:[%s0 + $0x398] sm:$0xff]
  %v165 = vld [vmem:[%s0 + $0x3a0] sm:$0xff]
  %v166 = vld [vmem:[%s0 + $0x3a8] sm:$0xff]
  %v167 = vld [vmem:[%s0 + $0x3b0] sm:$0xff]
  %v168 = vld [vmem:[%s0 + $0x3b8] sm:$0xff]
  %v169 = vld [vmem:[%s0 + $0x3c0] sm:$0xff]
  %v170 = vld [vmem:[%s0 + $0x3c8] sm:$0xff]
  %v171 = vld [vmem:[%s0 + $0x3d0] sm:$0xff]
  %v172 = vld [vmem:[%s0 + $0x3d8] sm:$0xff]
  %v173 = vld [vmem:[%s0 + $0x3e0] sm:$0xff]
  %v174 = vld [vmem:[%s0 + $0x3e8] sm:$0xff]
  %v175 = vld [vmem:[%s0 + $0x3f0] sm:$0xff]
  %v176 = vld [vmem:[%s0 + $0x3f8] sm:$0xff]
  %v193 = vlaneseq
  %v194 = vshrl.u32 %v193, 7
  %v195 = vsub.s32 0, %v194
  %v196 = vrot.slane %v17, %v195
  %v197 = vlaneseq
  %v198 = vshrl.u32 %v197, 7
  %v199 = vsub.s32 0, %v198
  %v200 = vrot.slane %v18, %v199
  %v201 = vlaneseq
  %v202 = vshrl.u32 %v201, 7
  %v203 = vsub.s32 0, %v202
  %v204 = vrot.slane %v19, %v203
  %v205 = vlaneseq
  %v206 = vshrl.u32 %v205, 7
  %v207 = vsub.s32 0, %v206
  %v208 = vrot.slane %v20, %v207
  %v209 = vlaneseq
  %v210 = vshrl.u32 %v209, 7
  %v211 = vsub.s32 0, %v210
  %v212 = vrot.slane %v21, %v211
  %v213 = vlaneseq
  %v214 = vshrl.u32 %v213, 7
  %v215 = vsub.s32 0, %v214
  %v216 = vrot.slane %v22, %v215
  %v217 = vlaneseq
  %v218 = vshrl.u32 %v217, 7
  %v219 = vsub.s32 0, %v218
  %v220 = vrot.slane %v23, %v219
  %v221 = vlaneseq
  %v222 = vshrl.u32 %v221, 7
  %v223 = vsub.s32 0, %v222
  %v224 = vrot.slane %v24, %v223
  %v225 = vlaneseq
  %v226 = vshrl.u32 %v225, 7
  %v227 = vsub.s32 0, %v226
  %v228 = vrot.slane %v25, %v227
  %v229 = vlaneseq
  %v230 = vshrl.u32 %v229, 7
  %v231 = vsub.s32 0, %v230
  %v232 = vrot.slane %v26, %v231
  %v233 = vlaneseq
  %v234 = vshrl.u32 %v233, 7
  %v235 = vsub.s32 0, %v234
  %v236 = vrot.slane %v27, %v235
  %v237 = vlaneseq
  %v238 = vshrl.u32 %v237, 7
  %v239 = vsub.s32 0, %v238
  %v240 = vrot.slane %v28, %v239
  %v241 = vlaneseq
  %v242 = vshrl.u32 %v241, 7
  %v243 = vsub.s32 0, %v242
  %v244 = vrot.slane %v29, %v243
  %v245 = vlaneseq
  %v246 = vshrl.u32 %v245, 7
  %v247 = vsub.s32 0, %v246
  %v248 = vrot.slane %v30, %v247
  %v249 = vlaneseq
  %v250 = vshrl.u32 %v249, 7
  %v251 = vsub.s32 0, %v250
  %v252 = vrot.slane %v31, %v251
  %v253 = vlaneseq
  %v254 = vshrl.u32 %v253, 7
  %v255 = vsub.s32 0, %v254
  %v256 = vrot.slane %v32, %v255
  %257 = vset.pattern.permute.xlu0 0
  %258 = vperm.xlu0 %257, %v196
  %v259 = vpop.permute.xlu0 %258
  %261 = vset.pattern.permute.xlu0 0
  %262 = vperm.xlu0 %261, %v200
  %v263 = vpop.permute.xlu0 %262
  %265 = vset.pattern.permute.xlu0 0
  %266 = vperm.xlu0 %265, %v204
  %v267 = vpop.permute.xlu0 %266
  %269 = vset.pattern.permute.xlu0 0
  %270 = vperm.xlu0 %269, %v208
  %v271 = vpop.permute.xlu0 %270
  %273 = vset.pattern.permute.xlu0 0
  %274 = vperm.xlu0 %273, %v212
  %v275 = vpop.permute.xlu0 %274
  %277 = vset.pattern.permute.xlu0 0
  %278 = vperm.xlu0 %277, %v216
  %v279 = vpop.permute.xlu0 %278
  %281 = vset.pattern.permute.xlu0 0
  %282 = vperm.xlu0 %281, %v220
  %v283 = vpop.permute.xlu0 %282
  %285 = vset.pattern.permute.xlu0 0
  %286 = vperm.xlu0 %285, %v224
  %v287 = vpop.permute.xlu0 %286
  %289 = vset.pattern.permute.xlu0 0
  %290 = vperm.xlu0 %289, %v228
  %v291 = vpop.permute.xlu0 %290
  %293 = vset.pattern.permute.xlu0 0
  %294 = vperm.xlu0 %293, %v232
  %v295 = vpop.permute.xlu0 %294
  %297 = vset.pattern.permute.xlu0 0
  %298 = vperm.xlu0 %297, %v236
  %v299 = vpop.permute.xlu0 %298
  %301 = vset.pattern.permute.xlu0 0
  %302 = vperm.xlu0 %301, %v240
  %v303 = vpop.permute.xlu0 %302
  %305 = vset.pattern.permute.xlu0 0
  %306 = vperm.xlu0 %305, %v244
  %v307 = vpop.permute.xlu0 %306
  %309 = vset.pattern.permute.xlu0 0
  %310 = vperm.xlu0 %309, %v248
  %v311 = vpop.permute.xlu0 %310
  %313 = vset.pattern.permute.xlu0 0
  %314 = vperm.xlu0 %313, %v252
  %v315 = vpop.permute.xlu0 %314
  %317 = vset.pattern.permute.xlu0 0
  %318 = vperm.xlu0 %317, %v256
  %v319 = vpop.permute.xlu0 %318
  %v321 = vmul.f32 %v49, %v259
  %v322 = vmul.f32 %v50, %v259
  %v323 = vmul.f32 %v51, %v259
  %v324 = vmul.f32 %v52, %v259
  %v325 = vmul.f32 %v53, %v259
  %v326 = vmul.f32 %v54, %v259
  %v327 = vmul.f32 %v55, %v259
  %v328 = vmul.f32 %v56, %v259
  %v329 = vmul.f32 %v57, %v263
  %v330 = vmul.f32 %v58, %v263
  %v331 = vmul.f32 %v59, %v263
  %v332 = vmul.f32 %v60, %v263
  %v333 = vmul.f32 %v61, %v263
  %v334 = vmul.f32 %v62, %v263
  %v335 = vmul.f32 %v63, %v263
  %v336 = vmul.f32 %v64, %v263
  %v337 = vmul.f32 %v65, %v267
  %v338 = vmul.f32 %v66, %v267
  %v339 = vmul.f32 %v67, %v267
  %v340 = vmul.f32 %v68, %v267
  %v341 = vmul.f32 %v69, %v267
  %v342 = vmul.f32 %v70, %v267
  %v343 = vmul.f32 %v71, %v267
  %v344 = vmul.f32 %v72, %v267
  %v345 = vmul.f32 %v73, %v271
  %v346 = vmul.f32 %v74, %v271
  %v347 = vmul.f32 %v75, %v271
  %v348 = vmul.f32 %v76, %v271
  %v349 = vmul.f32 %v77, %v271
  %v350 = vmul.f32 %v78, %v271
  %v351 = vmul.f32 %v79, %v271
  %v352 = vmul.f32 %v80, %v271
  %v353 = vmul.f32 %v81, %v275
  %v354 = vmul.f32 %v82, %v275
  %v355 = vmul.f32 %v83, %v275
  %v356 = vmul.f32 %v84, %v275
  %v357 = vmul.f32 %v85, %v275
  %v358 = vmul.f32 %v86, %v275
  %v359 = vmul.f32 %v87, %v275
  %v360 = vmul.f32 %v88, %v275
  %v361 = vmul.f32 %v89, %v279
  %v362 = vmul.f32 %v90, %v279
  %v363 = vmul.f32 %v91, %v279
  %v364 = vmul.f32 %v92, %v279
  %v365 = vmul.f32 %v93, %v279
  %v366 = vmul.f32 %v94, %v279
  %v367 = vmul.f32 %v95, %v279
  %v368 = vmul.f32 %v96, %v279
  %v369 = vmul.f32 %v97, %v283
  %v370 = vmul.f32 %v98, %v283
  %v371 = vmul.f32 %v99, %v283
  %v372 = vmul.f32 %v100, %v283
  %v373 = vmul.f32 %v101, %v283
  %v374 = vmul.f32 %v102, %v283
  %v375 = vmul.f32 %v103, %v283
  %v376 = vmul.f32 %v104, %v283
  %v377 = vmul.f32 %v105, %v287
  %v378 = vmul.f32 %v106, %v287
  %v379 = vmul.f32 %v107, %v287
  %v380 = vmul.f32 %v108, %v287
  %v381 = vmul.f32 %v109, %v287
  %v382 = vmul.f32 %v110, %v287
  %v383 = vmul.f32 %v111, %v287
  %v384 = vmul.f32 %v112, %v287
  %v385 = vmul.f32 %v113, %v291
  %v386 = vmul.f32 %v114, %v291
  %v387 = vmul.f32 %v115, %v291
  %v388 = vmul.f32 %v116, %v291
  %v389 = vmul.f32 %v117, %v291
  %v390 = vmul.f32 %v118, %v291
  %v391 = vmul.f32 %v119, %v291
  %v392 = vmul.f32 %v120, %v291
  %v393 = vmul.f32 %v121, %v295
  %v394 = vmul.f32 %v122, %v295
  %v395 = vmul.f32 %v123, %v295
  %v396 = vmul.f32 %v124, %v295
  %v397 = vmul.f32 %v125, %v295
  %v398 = vmul.f32 %v126, %v295
  %v399 = vmul.f32 %v127, %v295
  %v400 = vmul.f32 %v128, %v295
  %v401 = vmul.f32 %v129, %v299
  %v402 = vmul.f32 %v130, %v299
  %v403 = vmul.f32 %v131, %v299
  %v404 = vmul.f32 %v132, %v299
  %v405 = vmul.f32 %v133, %v299
  %v406 = vmul.f32 %v134, %v299
  %v407 = vmul.f32 %v135, %v299
  %v408 = vmul.f32 %v136, %v299
  %v409 = vmul.f32 %v137, %v303
  %v410 = vmul.f32 %v138, %v303
  %v411 = vmul.f32 %v139, %v303
  %v412 = vmul.f32 %v140, %v303
  %v413 = vmul.f32 %v141, %v303
  %v414 = vmul.f32 %v142, %v303
  %v415 = vmul.f32 %v143, %v303
  %v416 = vmul.f32 %v144, %v303
  %v417 = vmul.f32 %v145, %v307
  %v418 = vmul.f32 %v146, %v307
  %v419 = vmul.f32 %v147, %v307
  %v420 = vmul.f32 %v148, %v307
  %v421 = vmul.f32 %v149, %v307
  %v422 = vmul.f32 %v150, %v307
  %v423 = vmul.f32 %v151, %v307
  %v424 = vmul.f32 %v152, %v307
  %v425 = vmul.f32 %v153, %v311
  %v426 = vmul.f32 %v154, %v311
  %v427 = vmul.f32 %v155, %v311
  %v428 = vmul.f32 %v156, %v311
  %v429 = vmul.f32 %v157, %v311
  %v430 = vmul.f32 %v158, %v311
  %v431 = vmul.f32 %v159, %v311
  %v432 = vmul.f32 %v160, %v311
  %v433 = vmul.f32 %v161, %v315
  %v434 = vmul.f32 %v162, %v315
  %v435 = vmul.f32 %v163, %v315
  %v436 = vmul.f32 %v164, %v315
  %v437 = vmul.f32 %v165, %v315
  %v438 = vmul.f32 %v166, %v315
  %v439 = vmul.f32 %v167, %v315
  %v440 = vmul.f32 %v168, %v315
  %v441 = vmul.f32 %v169, %v319
  %v442 = vmul.f32 %v170, %v319
  %v443 = vmul.f32 %v171, %v319
  %v444 = vmul.f32 %v172, %v319
  %v445 = vmul.f32 %v173, %v319
  %v446 = vmul.f32 %v174, %v319
  %v447 = vmul.f32 %v175, %v319
  %v448 = vmul.f32 %v176, %v319
  %v465 = vlaneseq
  %v466 = vshrl.u32 %v465, 7
  %v467 = vsub.s32 0, %v466
  %v468 = vrot.slane %v33, %v467
  %v469 = vlaneseq
  %v470 = vshrl.u32 %v469, 7
  %v471 = vsub.s32 0, %v470
  %v472 = vrot.slane %v34, %v471
  %v473 = vlaneseq
  %v474 = vshrl.u32 %v473, 7
  %v475 = vsub.s32 0, %v474
  %v476 = vrot.slane %v35, %v475
  %v477 = vlaneseq
  %v478 = vshrl.u32 %v477, 7
  %v479 = vsub.s32 0, %v478
  %v480 = vrot.slane %v36, %v479
  %v481 = vlaneseq
  %v482 = vshrl.u32 %v481, 7
  %v483 = vsub.s32 0, %v482
  %v484 = vrot.slane %v37, %v483
  %v485 = vlaneseq
  %v486 = vshrl.u32 %v485, 7
  %v487 = vsub.s32 0, %v486
  %v488 = vrot.slane %v38, %v487
  %v489 = vlaneseq
  %v490 = vshrl.u32 %v489, 7
  %v491 = vsub.s32 0, %v490
  %v492 = vrot.slane %v39, %v491
  %v493 = vlaneseq
  %v494 = vshrl.u32 %v493, 7
  %v495 = vsub.s32 0, %v494
  %v496 = vrot.slane %v40, %v495
  %v497 = vlaneseq
  %v498 = vshrl.u32 %v497, 7
  %v499 = vsub.s32 0, %v498
  %v500 = vrot.slane %v41, %v499
  %v501 = vlaneseq
  %v502 = vshrl.u32 %v501, 7
  %v503 = vsub.s32 0, %v502
  %v504 = vrot.slane %v42, %v503
  %v505 = vlaneseq
  %v506 = vshrl.u32 %v505, 7
  %v507 = vsub.s32 0, %v506
  %v508 = vrot.slane %v43, %v507
  %v509 = vlaneseq
  %v510 = vshrl.u32 %v509, 7
  %v511 = vsub.s32 0, %v510
  %v512 = vrot.slane %v44, %v511
  %v513 = vlaneseq
  %v514 = vshrl.u32 %v513, 7
  %v515 = vsub.s32 0, %v514
  %v516 = vrot.slane %v45, %v515
  %v517 = vlaneseq
  %v518 = vshrl.u32 %v517, 7
  %v519 = vsub.s32 0, %v518
  %v520 = vrot.slane %v46, %v519
  %v521 = vlaneseq
  %v522 = vshrl.u32 %v521, 7
  %v523 = vsub.s32 0, %v522
  %v524 = vrot.slane %v47, %v523
  %v525 = vlaneseq
  %v526 = vshrl.u32 %v525, 7
  %v527 = vsub.s32 0, %v526
  %v528 = vrot.slane %v48, %v527
  %529 = vset.pattern.permute.xlu0 0
  %530 = vperm.xlu0 %529, %v468
  %v531 = vpop.permute.xlu0 %530
  %533 = vset.pattern.permute.xlu0 0
  %534 = vperm.xlu0 %533, %v472
  %v535 = vpop.permute.xlu0 %534
  %537 = vset.pattern.permute.xlu0 0
  %538 = vperm.xlu0 %537, %v476
  %v539 = vpop.permute.xlu0 %538
  %541 = vset.pattern.permute.xlu0 0
  %542 = vperm.xlu0 %541, %v480
  %v543 = vpop.permute.xlu0 %542
  %545 = vset.pattern.permute.xlu0 0
  %546 = vperm.xlu0 %545, %v484
  %v547 = vpop.permute.xlu0 %546
  %549 = vset.pattern.permute.xlu0 0
  %550 = vperm.xlu0 %549, %v488
  %v551 = vpop.permute.xlu0 %550
  %553 = vset.pattern.permute.xlu0 0
  %554 = vperm.xlu0 %553, %v492
  %v555 = vpop.permute.xlu0 %554
  %557 = vset.pattern.permute.xlu0 0
  %558 = vperm.xlu0 %557, %v496
  %v559 = vpop.permute.xlu0 %558
  %561 = vset.pattern.permute.xlu0 0
  %562 = vperm.xlu0 %561, %v500
  %v563 = vpop.permute.xlu0 %562
  %565 = vset.pattern.permute.xlu0 0
  %566 = vperm.xlu0 %565, %v504
  %v567 = vpop.permute.xlu0 %566
  %569 = vset.pattern.permute.xlu0 0
  %570 = vperm.xlu0 %569, %v508
  %v571 = vpop.permute.xlu0 %570
  %573 = vset.pattern.permute.xlu0 0
  %574 = vperm.xlu0 %573, %v512
  %v575 = vpop.permute.xlu0 %574
  %577 = vset.pattern.permute.xlu0 0
  %578 = vperm.xlu0 %577, %v516
  %v579 = vpop.permute.xlu0 %578
  %581 = vset.pattern.permute.xlu0 0
  %582 = vperm.xlu0 %581, %v520
  %v583 = vpop.permute.xlu0 %582
  %585 = vset.pattern.permute.xlu0 0
  %586 = vperm.xlu0 %585, %v524
  %v587 = vpop.permute.xlu0 %586
  %589 = vset.pattern.permute.xlu0 0
  %590 = vperm.xlu0 %589, %v528
  %v591 = vpop.permute.xlu0 %590
  %v593 = vadd.f32 %v321, %v531
  %v594 = vadd.f32 %v322, %v531
  %v595 = vadd.f32 %v323, %v531
  %v596 = vadd.f32 %v324, %v531
  %v597 = vadd.f32 %v325, %v531
  %v598 = vadd.f32 %v326, %v531
  %v599 = vadd.f32 %v327, %v531
  %v600 = vadd.f32 %v328, %v531
  %v601 = vadd.f32 %v329, %v535
  %v602 = vadd.f32 %v330, %v535
  %v603 = vadd.f32 %v331, %v535
  %v604 = vadd.f32 %v332, %v535
  %v605 = vadd.f32 %v333, %v535
  %v606 = vadd.f32 %v334, %v535
  %v607 = vadd.f32 %v335, %v535
  %v608 = vadd.f32 %v336, %v535
  %v609 = vadd.f32 %v337, %v539
  %v610 = vadd.f32 %v338, %v539
  %v611 = vadd.f32 %v339, %v539
  %v612 = vadd.f32 %v340, %v539
  %v613 = vadd.f32 %v341, %v539
  %v614 = vadd.f32 %v342, %v539
  %v615 = vadd.f32 %v343, %v539
  %v616 = vadd.f32 %v344, %v539
  %v617 = vadd.f32 %v345, %v543
  %v618 = vadd.f32 %v346, %v543
  %v619 = vadd.f32 %v347, %v543
  %v620 = vadd.f32 %v348, %v543
  %v621 = vadd.f32 %v349, %v543
  %v622 = vadd.f32 %v350, %v543
  %v623 = vadd.f32 %v351, %v543
  %v624 = vadd.f32 %v352, %v543
  %v625 = vadd.f32 %v353, %v547
  %v626 = vadd.f32 %v354, %v547
  %v627 = vadd.f32 %v355, %v547
  %v628 = vadd.f32 %v356, %v547
  %v629 = vadd.f32 %v357, %v547
  %v630 = vadd.f32 %v358, %v547
  %v631 = vadd.f32 %v359, %v547
  %v632 = vadd.f32 %v360, %v547
  %v633 = vadd.f32 %v361, %v551
  %v634 = vadd.f32 %v362, %v551
  %v635 = vadd.f32 %v363, %v551
  %v636 = vadd.f32 %v364, %v551
  %v637 = vadd.f32 %v365, %v551
  %v638 = vadd.f32 %v366, %v551
  %v639 = vadd.f32 %v367, %v551
  %v640 = vadd.f32 %v368, %v551
  %v641 = vadd.f32 %v369, %v555
  %v642 = vadd.f32 %v370, %v555
  %v643 = vadd.f32 %v371, %v555
  %v644 = vadd.f32 %v372, %v555
  %v645 = vadd.f32 %v373, %v555
  %v646 = vadd.f32 %v374, %v555
  %v647 = vadd.f32 %v375, %v555
  %v648 = vadd.f32 %v376, %v555
  %v649 = vadd.f32 %v377, %v559
  %v650 = vadd.f32 %v378, %v559
  %v651 = vadd.f32 %v379, %v559
  %v652 = vadd.f32 %v380, %v559
  %v653 = vadd.f32 %v381, %v559
  %v654 = vadd.f32 %v382, %v559
  %v655 = vadd.f32 %v383, %v559
  %v656 = vadd.f32 %v384, %v559
  %v657 = vadd.f32 %v385, %v563
  %v658 = vadd.f32 %v386, %v563
  %v659 = vadd.f32 %v387, %v563
  %v660 = vadd.f32 %v388, %v563
  %v661 = vadd.f32 %v389, %v563
  %v662 = vadd.f32 %v390, %v563
  %v663 = vadd.f32 %v391, %v563
  %v664 = vadd.f32 %v392, %v563
  %v665 = vadd.f32 %v393, %v567
  %v666 = vadd.f32 %v394, %v567
  %v667 = vadd.f32 %v395, %v567
  %v668 = vadd.f32 %v396, %v567
  %v669 = vadd.f32 %v397, %v567
  %v670 = vadd.f32 %v398, %v567
  %v671 = vadd.f32 %v399, %v567
  %v672 = vadd.f32 %v400, %v567
  %v673 = vadd.f32 %v401, %v571
  %v674 = vadd.f32 %v402, %v571
  %v675 = vadd.f32 %v403, %v571
  %v676 = vadd.f32 %v404, %v571
  %v677 = vadd.f32 %v405, %v571
  %v678 = vadd.f32 %v406, %v571
  %v679 = vadd.f32 %v407, %v571
  %v680 = vadd.f32 %v408, %v571
  %v681 = vadd.f32 %v409, %v575
  %v682 = vadd.f32 %v410, %v575
  %v683 = vadd.f32 %v411, %v575
  %v684 = vadd.f32 %v412, %v575
  %v685 = vadd.f32 %v413, %v575
  %v686 = vadd.f32 %v414, %v575
  %v687 = vadd.f32 %v415, %v575
  %v688 = vadd.f32 %v416, %v575
  %v689 = vadd.f32 %v417, %v579
  %v690 = vadd.f32 %v418, %v579
  %v691 = vadd.f32 %v419, %v579
  %v692 = vadd.f32 %v420, %v579
  %v693 = vadd.f32 %v421, %v579
  %v694 = vadd.f32 %v422, %v579
  %v695 = vadd.f32 %v423, %v579
  %v696 = vadd.f32 %v424, %v579
  %v697 = vadd.f32 %v425, %v583
  %v698 = vadd.f32 %v426, %v583
  %v699 = vadd.f32 %v427, %v583
  %v700 = vadd.f32 %v428, %v583
  %v701 = vadd.f32 %v429, %v583
  %v702 = vadd.f32 %v430, %v583
  %v703 = vadd.f32 %v431, %v583
  %v704 = vadd.f32 %v432, %v583
  %v705 = vadd.f32 %v433, %v587
  %v706 = vadd.f32 %v434, %v587
  %v707 = vadd.f32 %v435, %v587
  %v708 = vadd.f32 %v436, %v587
  %v709 = vadd.f32 %v437, %v587
  %v710 = vadd.f32 %v438, %v587
  %v711 = vadd.f32 %v439, %v587
  %v712 = vadd.f32 %v440, %v587
  %v713 = vadd.f32 %v441, %v591
  %v714 = vadd.f32 %v442, %v591
  %v715 = vadd.f32 %v443, %v591
  %v716 = vadd.f32 %v444, %v591
  %v717 = vadd.f32 %v445, %v591
  %v718 = vadd.f32 %v446, %v591
  %v719 = vadd.f32 %v447, %v591
  %v720 = vadd.f32 %v448, %v591
  %v721 = vld [vmem:[%s3] sm:$0xff]
  %v722 = vld [vmem:[%s3 + $0x8] sm:$0x3]
  %v723 = vld [vmem:[%s3 + $0x10] sm:$0xff]
  %v724 = vld [vmem:[%s3 + $0x18] sm:$0x3]
  %v725 = vld [vmem:[%s3 + $0x20] sm:$0xff]
  %v726 = vld [vmem:[%s3 + $0x28] sm:$0x3]
  %v727 = vld [vmem:[%s3 + $0x30] sm:$0xff]
  %v728 = vld [vmem:[%s3 + $0x38] sm:$0x3]
  %v729 = vld [vmem:[%s3 + $0x40] sm:$0xff]
  %v730 = vld [vmem:[%s3 + $0x48] sm:$0x3]
  %v731 = vld [vmem:[%s3 + $0x50] sm:$0xff]
  %v732 = vld [vmem:[%s3 + $0x58] sm:$0x3]
  %v733 = vld [vmem:[%s3 + $0x60] sm:$0xff]
  %v734 = vld [vmem:[%s3 + $0x68] sm:$0x3]
  %v735 = vld [vmem:[%s3 + $0x70] sm:$0xff]
  %v736 = vld [vmem:[%s3 + $0x78] sm:$0x3]
  %v737 = vld [vmem:[%s3 + $0x80] sm:$0xff]
  %v738 = vld [vmem:[%s3 + $0x88] sm:$0x3]
  %v739 = vld [vmem:[%s3 + $0x90] sm:$0xff]
  %v740 = vld [vmem:[%s3 + $0x98] sm:$0x3]
  %v757 = vmul.f32 %v721, %v468
  %v758 = vmul.f32 %v722, %v468
  %v759 = vmul.f32 %v723, %v468
  %v760 = vmul.f32 %v724, %v468
  %v761 = vmul.f32 %v725, %v468
  %v762 = vmul.f32 %v726, %v468
  %v763 = vmul.f32 %v727, %v468
  %v764 = vmul.f32 %v728, %v468
  %v765 = vmul.f32 %v729, %v468
  %v766 = vmul.f32 %v730, %v468
  %v767 = vmul.f32 %v731, %v468
  %v768 = vmul.f32 %v732, %v468
  %v769 = vmul.f32 %v733, %v468
  %v770 = vmul.f32 %v734, %v468
  %v771 = vmul.f32 %v735, %v468
  %v772 = vmul.f32 %v736, %v468
  %v773 = vmul.f32 %v737, %v468
  %v774 = vmul.f32 %v738, %v468
  %v775 = vmul.f32 %v739, %v468
  %v776 = vmul.f32 %v740, %v468
  %v777 = vmul.f32 %v721, %v472
  %v778 = vmul.f32 %v722, %v472
  %v779 = vmul.f32 %v723, %v472
  %v780 = vmul.f32 %v724, %v472
  %v781 = vmul.f32 %v725, %v472
  %v782 = vmul.f32 %v726, %v472
  %v783 = vmul.f32 %v727, %v472
  %v784 = vmul.f32 %v728, %v472
  %v785 = vmul.f32 %v729, %v472
  %v786 = vmul.f32 %v730, %v472
  %v787 = vmul.f32 %v731, %v472
  %v788 = vmul.f32 %v732, %v472
  %v789 = vmul.f32 %v733, %v472
  %v790 = vmul.f32 %v734, %v472
  %v791 = vmul.f32 %v735, %v472
  %v792 = vmul.f32 %v736, %v472
  %v793 = vmul.f32 %v737, %v472
  %v794 = vmul.f32 %v738, %v472
  %v795 = vmul.f32 %v739, %v472
  %v796 = vmul.f32 %v740, %v472
  %v797 = vmul.f32 %v721, %v476
  %v798 = vmul.f32 %v722, %v476
  %v799 = vmul.f32 %v723, %v476
  %v800 = vmul.f32 %v724, %v476
  %v801 = vmul.f32 %v725, %v476
  %v802 = vmul.f32 %v726, %v476
  %v803 = vmul.f32 %v727, %v476
  %v804 = vmul.f32 %v728, %v476
  %v805 = vmul.f32 %v729, %v476
  %v806 = vmul.f32 %v730, %v476
  %v807 = vmul.f32 %v731, %v476
  %v808 = vmul.f32 %v732, %v476
  %v809 = vmul.f32 %v733, %v476
  %v810 = vmul.f32 %v734, %v476
  %v811 = vmul.f32 %v735, %v476
  %v812 = vmul.f32 %v736, %v476
  %v813 = vmul.f32 %v737, %v476
  %v814 = vmul.f32 %v738, %v476
  %v815 = vmul.f32 %v739, %v476
  %v816 = vmul.f32 %v740, %v476
  %v817 = vmul.f32 %v721, %v480
  %v818 = vmul.f32 %v722, %v480
  %v819 = vmul.f32 %v723, %v480
  %v820 = vmul.f32 %v724, %v480
  %v821 = vmul.f32 %v725, %v480
  %v822 = vmul.f32 %v726, %v480
  %v823 = vmul.f32 %v727, %v480
  %v824 = vmul.f32 %v728, %v480
  %v825 = vmul.f32 %v729, %v480
  %v826 = vmul.f32 %v730, %v480
  %v827 = vmul.f32 %v731, %v480
  %v828 = vmul.f32 %v732, %v480
  %v829 = vmul.f32 %v733, %v480
  %v830 = vmul.f32 %v734, %v480
  %v831 = vmul.f32 %v735, %v480
  %v832 = vmul.f32 %v736, %v480
  %v833 = vmul.f32 %v737, %v480
  %v834 = vmul.f32 %v738, %v480
  %v835 = vmul.f32 %v739, %v480
  %v836 = vmul.f32 %v740, %v480
  %v837 = vmul.f32 %v721, %v484
  %v838 = vmul.f32 %v722, %v484
  %v839 = vmul.f32 %v723, %v484
  %v840 = vmul.f32 %v724, %v484
  %v841 = vmul.f32 %v725, %v484
  %v842 = vmul.f32 %v726, %v484
  %v843 = vmul.f32 %v727, %v484
  %v844 = vmul.f32 %v728, %v484
  %v845 = vmul.f32 %v729, %v484
  %v846 = vmul.f32 %v730, %v484
  %v847 = vmul.f32 %v731, %v484
  %v848 = vmul.f32 %v732, %v484
  %v849 = vmul.f32 %v733, %v484
  %v850 = vmul.f32 %v734, %v484
  %v851 = vmul.f32 %v735, %v484
  %v852 = vmul.f32 %v736, %v484
  %v853 = vmul.f32 %v737, %v484
  %v854 = vmul.f32 %v738, %v484
  %v855 = vmul.f32 %v739, %v484
  %v856 = vmul.f32 %v740, %v484
  %v857 = vmul.f32 %v721, %v488
  %v858 = vmul.f32 %v722, %v488
  %v859 = vmul.f32 %v723, %v488
  %v860 = vmul.f32 %v724, %v488
  %v861 = vmul.f32 %v725, %v488
  %v862 = vmul.f32 %v726, %v488
  %v863 = vmul.f32 %v727, %v488
  %v864 = vmul.f32 %v728, %v488
  %v865 = vmul.f32 %v729, %v488
  %v866 = vmul.f32 %v730, %v488
  %v867 = vmul.f32 %v731, %v488
  %v868 = vmul.f32 %v732, %v488
  %v869 = vmul.f32 %v733, %v488
  %v870 = vmul.f32 %v734, %v488
  %v871 = vmul.f32 %v735, %v488
  %v872 = vmul.f32 %v736, %v488
  %v873 = vmul.f32 %v737, %v488
  %v874 = vmul.f32 %v738, %v488
  %v875 = vmul.f32 %v739, %v488
  %v876 = vmul.f32 %v740, %v488
  %v877 = vmul.f32 %v721, %v492
  %v878 = vmul.f32 %v722, %v492
  %v879 = vmul.f32 %v723, %v492
  %v880 = vmul.f32 %v724, %v492
  %v881 = vmul.f32 %v725, %v492
  %v882 = vmul.f32 %v726, %v492
  %v883 = vmul.f32 %v727, %v492
  %v884 = vmul.f32 %v728, %v492
  %v885 = vmul.f32 %v729, %v492
  %v886 = vmul.f32 %v730, %v492
  %v887 = vmul.f32 %v731, %v492
  %v888 = vmul.f32 %v732, %v492
  %v889 = vmul.f32 %v733, %v492
  %v890 = vmul.f32 %v734, %v492
  %v891 = vmul.f32 %v735, %v492
  %v892 = vmul.f32 %v736, %v492
  %v893 = vmul.f32 %v737, %v492
  %v894 = vmul.f32 %v738, %v492
  %v895 = vmul.f32 %v739, %v492
  %v896 = vmul.f32 %v740, %v492
  %v897 = vmul.f32 %v721, %v496
  %v898 = vmul.f32 %v722, %v496
  %v899 = vmul.f32 %v723, %v496
  %v900 = vmul.f32 %v724, %v496
  %v901 = vmul.f32 %v725, %v496
  %v902 = vmul.f32 %v726, %v496
  %v903 = vmul.f32 %v727, %v496
  %v904 = vmul.f32 %v728, %v496
  %v905 = vmul.f32 %v729, %v496
  %v906 = vmul.f32 %v730, %v496
  %v907 = vmul.f32 %v731, %v496
  %v908 = vmul.f32 %v732, %v496
  %v909 = vmul.f32 %v733, %v496
  %v910 = vmul.f32 %v734, %v496
  %v911 = vmul.f32 %v735, %v496
  %v912 = vmul.f32 %v736, %v496
  %v913 = vmul.f32 %v737, %v496
  %v914 = vmul.f32 %v738, %v496
  %v915 = vmul.f32 %v739, %v496
  %v916 = vmul.f32 %v740, %v496
  %v917 = vmul.f32 %v721, %v500
  %v918 = vmul.f32 %v722, %v500
  %v919 = vmul.f32 %v723, %v500
  %v920 = vmul.f32 %v724, %v500
  %v921 = vmul.f32 %v725, %v500
  %v922 = vmul.f32 %v726, %v500
  %v923 = vmul.f32 %v727, %v500
  %v924 = vmul.f32 %v728, %v500
  %v925 = vmul.f32 %v729, %v500
  %v926 = vmul.f32 %v730, %v500
  %v927 = vmul.f32 %v731, %v500
  %v928 = vmul.f32 %v732, %v500
  %v929 = vmul.f32 %v733, %v500
  %v930 = vmul.f32 %v734, %v500
  %v931 = vmul.f32 %v735, %v500
  %v932 = vmul.f32 %v736, %v500
  %v933 = vmul.f32 %v737, %v500
  %v934 = vmul.f32 %v738, %v500
  %v935 = vmul.f32 %v739, %v500
  %v936 = vmul.f32 %v740, %v500
  %v937 = vmul.f32 %v721, %v504
  %v938 = vmul.f32 %v722, %v504
  %v939 = vmul.f32 %v723, %v504
  %v940 = vmul.f32 %v724, %v504
  %v941 = vmul.f32 %v725, %v504
  %v942 = vmul.f32 %v726, %v504
  %v943 = vmul.f32 %v727, %v504
  %v944 = vmul.f32 %v728, %v504
  %v945 = vmul.f32 %v729, %v504
  %v946 = vmul.f32 %v730, %v504
  %v947 = vmul.f32 %v731, %v504
  %v948 = vmul.f32 %v732, %v504
  %v949 = vmul.f32 %v733, %v504
  %v950 = vmul.f32 %v734, %v504
  %v951 = vmul.f32 %v735, %v504
  %v952 = vmul.f32 %v736, %v504
  %v953 = vmul.f32 %v737, %v504
  %v954 = vmul.f32 %v738, %v504
  %v955 = vmul.f32 %v739, %v504
  %v956 = vmul.f32 %v740, %v504
  %v957 = vmul.f32 %v721, %v508
  %v958 = vmul.f32 %v722, %v508
  %v959 = vmul.f32 %v723, %v508
  %v960 = vmul.f32 %v724, %v508
  %v961 = vmul.f32 %v725, %v508
  %v962 = vmul.f32 %v726, %v508
  %v963 = vmul.f32 %v727, %v508
  %v964 = vmul.f32 %v728, %v508
  %v965 = vmul.f32 %v729, %v508
  %v966 = vmul.f32 %v730, %v508
  %v967 = vmul.f32 %v731, %v508
  %v968 = vmul.f32 %v732, %v508
  %v969 = vmul.f32 %v733, %v508
  %v970 = vmul.f32 %v734, %v508
  %v971 = vmul.f32 %v735, %v508
  %v972 = vmul.f32 %v736, %v508
  %v973 = vmul.f32 %v737, %v508
  %v974 = vmul.f32 %v738, %v508
  %v975 = vmul.f32 %v739, %v508
  %v976 = vmul.f32 %v740, %v508
  %v977 = vmul.f32 %v721, %v512
  %v978 = vmul.f32 %v722, %v512
  %v979 = vmul.f32 %v723, %v512
  %v980 = vmul.f32 %v724, %v512
  %v981 = vmul.f32 %v725, %v512
  %v982 = vmul.f32 %v726, %v512
  %v983 = vmul.f32 %v727, %v512
  %v984 = vmul.f32 %v728, %v512
  %v985 = vmul.f32 %v729, %v512
  %v986 = vmul.f32 %v730, %v512
  %v987 = vmul.f32 %v731, %v512
  %v988 = vmul.f32 %v732, %v512
  %v989 = vmul.f32 %v733, %v512
  %v990 = vmul.f32 %v734, %v512
  %v991 = vmul.f32 %v735, %v512
  %v992 = vmul.f32 %v736, %v512
  %v993 = vmul.f32 %v737, %v512
  %v994 = vmul.f32 %v738, %v512
  %v995 = vmul.f32 %v739, %v512
  %v996 = vmul.f32 %v740, %v512
  %v997 = vmul.f32 %v721, %v516
  %v998 = vmul.f32 %v722, %v516
  %v999 = vmul.f32 %v723, %v516
  %v1000 = vmul.f32 %v724, %v516
  %v1001 = vmul.f32 %v725, %v516
  %v1002 = vmul.f32 %v726, %v516
  %v1003 = vmul.f32 %v727, %v516
  %v1004 = vmul.f32 %v728, %v516
  %v1005 = vmul.f32 %v729, %v516
  %v1006 = vmul.f32 %v730, %v516
  %v1007 = vmul.f32 %v731, %v516
  %v1008 = vmul.f32 %v732, %v516
  %v1009 = vmul.f32 %v733, %v516
  %v1010 = vmul.f32 %v734, %v516
  %v1011 = vmul.f32 %v735, %v516
  %v1012 = vmul.f32 %v736, %v516
  %v1013 = vmul.f32 %v737, %v516
  %v1014 = vmul.f32 %v738, %v516
  %v1015 = vmul.f32 %v739, %v516
  %v1016 = vmul.f32 %v740, %v516
  %v1017 = vmul.f32 %v721, %v520
  %v1018 = vmul.f32 %v722, %v520
  %v1019 = vmul.f32 %v723, %v520
  %v1020 = vmul.f32 %v724, %v520
  %v1021 = vmul.f32 %v725, %v520
  %v1022 = vmul.f32 %v726, %v520
  %v1023 = vmul.f32 %v727, %v520
  %v1024 = vmul.f32 %v728, %v520
  %v1025 = vmul.f32 %v729, %v520
  %v1026 = vmul.f32 %v730, %v520
  %v1027 = vmul.f32 %v731, %v520
  %v1028 = vmul.f32 %v732, %v520
  %v1029 = vmul.f32 %v733, %v520
  %v1030 = vmul.f32 %v734, %v520
  %v1031 = vmul.f32 %v735, %v520
  %v1032 = vmul.f32 %v736, %v520
  %v1033 = vmul.f32 %v737, %v520
  %v1034 = vmul.f32 %v738, %v520
  %v1035 = vmul.f32 %v739, %v520
  %v1036 = vmul.f32 %v740, %v520
  %v1037 = vmul.f32 %v721, %v524
  %v1038 = vmul.f32 %v722, %v524
  %v1039 = vmul.f32 %v723, %v524
  %v1040 = vmul.f32 %v724, %v524
  %v1041 = vmul.f32 %v725, %v524
  %v1042 = vmul.f32 %v726, %v524
  %v1043 = vmul.f32 %v727, %v524
  %v1044 = vmul.f32 %v728, %v524
  %v1045 = vmul.f32 %v729, %v524
  %v1046 = vmul.f32 %v730, %v524
  %v1047 = vmul.f32 %v731, %v524
  %v1048 = vmul.f32 %v732, %v524
  %v1049 = vmul.f32 %v733, %v524
  %v1050 = vmul.f32 %v734, %v524
  %v1051 = vmul.f32 %v735, %v524
  %v1052 = vmul.f32 %v736, %v524
  %v1053 = vmul.f32 %v737, %v524
  %v1054 = vmul.f32 %v738, %v524
  %v1055 = vmul.f32 %v739, %v524
  %v1056 = vmul.f32 %v740, %v524
  %v1057 = vmul.f32 %v721, %v528
  %v1058 = vmul.f32 %v722, %v528
  %v1059 = vmul.f32 %v723, %v528
  %v1060 = vmul.f32 %v724, %v528
  %v1061 = vmul.f32 %v725, %v528
  %v1062 = vmul.f32 %v726, %v528
  %v1063 = vmul.f32 %v727, %v528
  %v1064 = vmul.f32 %v728, %v528
  %v1065 = vmul.f32 %v729, %v528
  %v1066 = vmul.f32 %v730, %v528
  %v1067 = vmul.f32 %v731, %v528
  %v1068 = vmul.f32 %v732, %v528
  %v1069 = vmul.f32 %v733, %v528
  %v1070 = vmul.f32 %v734, %v528
  %v1071 = vmul.f32 %v735, %v528
  %v1072 = vmul.f32 %v736, %v528
  %v1073 = vmul.f32 %v737, %v528
  %v1074 = vmul.f32 %v738, %v528
  %v1075 = vmul.f32 %v739, %v528
  %v1076 = vmul.f32 %v740, %v528
  %1078 = vset.pattern.permute.xlu0 0
  %1079 = vperm.xlu0 %1078, %v757
  %v1080 = vpop.permute.xlu0 %1079
  %1083 = vset.pattern.permute.xlu0 0
  %1084 = vperm.xlu0 %1083, %v758
  %v1085 = vpop.permute.xlu0 %1084
  %1088 = vset.pattern.permute.xlu0 0
  %1089 = vperm.xlu0 %1088, %v759
  %v1090 = vpop.permute.xlu0 %1089
  %1093 = vset.pattern.permute.xlu0 0
  %1094 = vperm.xlu0 %1093, %v760
  %v1095 = vpop.permute.xlu0 %1094
  %1098 = vset.pattern.permute.xlu0 0
  %1099 = vperm.xlu0 %1098, %v761
  %v1100 = vpop.permute.xlu0 %1099
  %1103 = vset.pattern.permute.xlu0 0
  %1104 = vperm.xlu0 %1103, %v762
  %v1105 = vpop.permute.xlu0 %1104
  %1108 = vset.pattern.permute.xlu0 0
  %1109 = vperm.xlu0 %1108, %v763
  %v1110 = vpop.permute.xlu0 %1109
  %1113 = vset.pattern.permute.xlu0 0
  %1114 = vperm.xlu0 %1113, %v764
  %v1115 = vpop.permute.xlu0 %1114
  %1118 = vset.pattern.permute.xlu0 0
  %1119 = vperm.xlu0 %1118, %v765
  %v1120 = vpop.permute.xlu0 %1119
  %1123 = vset.pattern.permute.xlu0 0
  %1124 = vperm.xlu0 %1123, %v766
  %v1125 = vpop.permute.xlu0 %1124
  %1128 = vset.pattern.permute.xlu0 0
  %1129 = vperm.xlu0 %1128, %v767
  %v1130 = vpop.permute.xlu0 %1129
  %1133 = vset.pattern.permute.xlu0 0
  %1134 = vperm.xlu0 %1133, %v768
  %v1135 = vpop.permute.xlu0 %1134
  %1138 = vset.pattern.permute.xlu0 0
  %1139 = vperm.xlu0 %1138, %v769
  %v1140 = vpop.permute.xlu0 %1139
  %1143 = vset.pattern.permute.xlu0 0
  %1144 = vperm.xlu0 %1143, %v770
  %v1145 = vpop.permute.xlu0 %1144
  %1148 = vset.pattern.permute.xlu0 0
  %1149 = vperm.xlu0 %1148, %v771
  %v1150 = vpop.permute.xlu0 %1149
  %1153 = vset.pattern.permute.xlu0 0
  %1154 = vperm.xlu0 %1153, %v772
  %v1155 = vpop.permute.xlu0 %1154
  %1158 = vset.pattern.permute.xlu0 0
  %1159 = vperm.xlu0 %1158, %v773
  %v1160 = vpop.permute.xlu0 %1159
  %1163 = vset.pattern.permute.xlu0 0
  %1164 = vperm.xlu0 %1163, %v774
  %v1165 = vpop.permute.xlu0 %1164
  %1168 = vset.pattern.permute.xlu0 0
  %1169 = vperm.xlu0 %1168, %v775
  %v1170 = vpop.permute.xlu0 %1169
  %1173 = vset.pattern.permute.xlu0 0
  %1174 = vperm.xlu0 %1173, %v776
  %v1175 = vpop.permute.xlu0 %1174
  %1178 = vset.pattern.permute.xlu0 0
  %1179 = vperm.xlu0 %1178, %v777
  %v1180 = vpop.permute.xlu0 %1179
  %1183 = vset.pattern.permute.xlu0 0
  %1184 = vperm.xlu0 %1183, %v778
  %v1185 = vpop.permute.xlu0 %1184
  %1188 = vset.pattern.permute.xlu0 0
  %1189 = vperm.xlu0 %1188, %v779
  %v1190 = vpop.permute.xlu0 %1189
  %1193 = vset.pattern.permute.xlu0 0
  %1194 = vperm.xlu0 %1193, %v780
  %v1195 = vpop.permute.xlu0 %1194
  %1198 = vset.pattern.permute.xlu0 0
  %1199 = vperm.xlu0 %1198, %v781
  %v1200 = vpop.permute.xlu0 %1199
  %1203 = vset.pattern.permute.xlu0 0
  %1204 = vperm.xlu0 %1203, %v782
  %v1205 = vpop.permute.xlu0 %1204
  %1208 = vset.pattern.permute.xlu0 0
  %1209 = vperm.xlu0 %1208, %v783
  %v1210 = vpop.permute.xlu0 %1209
  %1213 = vset.pattern.permute.xlu0 0
  %1214 = vperm.xlu0 %1213, %v784
  %v1215 = vpop.permute.xlu0 %1214
  %1218 = vset.pattern.permute.xlu0 0
  %1219 = vperm.xlu0 %1218, %v785
  %v1220 = vpop.permute.xlu0 %1219
  %1223 = vset.pattern.permute.xlu0 0
  %1224 = vperm.xlu0 %1223, %v786
  %v1225 = vpop.permute.xlu0 %1224
  %1228 = vset.pattern.permute.xlu0 0
  %1229 = vperm.xlu0 %1228, %v787
  %v1230 = vpop.permute.xlu0 %1229
  %1233 = vset.pattern.permute.xlu0 0
  %1234 = vperm.xlu0 %1233, %v788
  %v1235 = vpop.permute.xlu0 %1234
  %1238 = vset.pattern.permute.xlu0 0
  %1239 = vperm.xlu0 %1238, %v789
  %v1240 = vpop.permute.xlu0 %1239
  %1243 = vset.pattern.permute.xlu0 0
  %1244 = vperm.xlu0 %1243, %v790
  %v1245 = vpop.permute.xlu0 %1244
  %1248 = vset.pattern.permute.xlu0 0
  %1249 = vperm.xlu0 %1248, %v791
  %v1250 = vpop.permute.xlu0 %1249
  %1253 = vset.pattern.permute.xlu0 0
  %1254 = vperm.xlu0 %1253, %v792
  %v1255 = vpop.permute.xlu0 %1254
  %1258 = vset.pattern.permute.xlu0 0
  %1259 = vperm.xlu0 %1258, %v793
  %v1260 = vpop.permute.xlu0 %1259
  %1263 = vset.pattern.permute.xlu0 0
  %1264 = vperm.xlu0 %1263, %v794
  %v1265 = vpop.permute.xlu0 %1264
  %1268 = vset.pattern.permute.xlu0 0
  %1269 = vperm.xlu0 %1268, %v795
  %v1270 = vpop.permute.xlu0 %1269
  %1273 = vset.pattern.permute.xlu0 0
  %1274 = vperm.xlu0 %1273, %v796
  %v1275 = vpop.permute.xlu0 %1274
  %1278 = vset.pattern.permute.xlu0 0
  %1279 = vperm.xlu0 %1278, %v797
  %v1280 = vpop.permute.xlu0 %1279
  %1283 = vset.pattern.permute.xlu0 0
  %1284 = vperm.xlu0 %1283, %v798
  %v1285 = vpop.permute.xlu0 %1284
  %1288 = vset.pattern.permute.xlu0 0
  %1289 = vperm.xlu0 %1288, %v799
  %v1290 = vpop.permute.xlu0 %1289
  %1293 = vset.pattern.permute.xlu0 0
  %1294 = vperm.xlu0 %1293, %v800
  %v1295 = vpop.permute.xlu0 %1294
  %1298 = vset.pattern.permute.xlu0 0
  %1299 = vperm.xlu0 %1298, %v801
  %v1300 = vpop.permute.xlu0 %1299
  %1303 = vset.pattern.permute.xlu0 0
  %1304 = vperm.xlu0 %1303, %v802
  %v1305 = vpop.permute.xlu0 %1304
  %1308 = vset.pattern.permute.xlu0 0
  %1309 = vperm.xlu0 %1308, %v803
  %v1310 = vpop.permute.xlu0 %1309
  %1313 = vset.pattern.permute.xlu0 0
  %1314 = vperm.xlu0 %1313, %v804
  %v1315 = vpop.permute.xlu0 %1314
  %1318 = vset.pattern.permute.xlu0 0
  %1319 = vperm.xlu0 %1318, %v805
  %v1320 = vpop.permute.xlu0 %1319
  %1323 = vset.pattern.permute.xlu0 0
  %1324 = vperm.xlu0 %1323, %v806
  %v1325 = vpop.permute.xlu0 %1324
  %1328 = vset.pattern.permute.xlu0 0
  %1329 = vperm.xlu0 %1328, %v807
  %v1330 = vpop.permute.xlu0 %1329
  %1333 = vset.pattern.permute.xlu0 0
  %1334 = vperm.xlu0 %1333, %v808
  %v1335 = vpop.permute.xlu0 %1334
  %1338 = vset.pattern.permute.xlu0 0
  %1339 = vperm.xlu0 %1338, %v809
  %v1340 = vpop.permute.xlu0 %1339
  %1343 = vset.pattern.permute.xlu0 0
  %1344 = vperm.xlu0 %1343, %v810
  %v1345 = vpop.permute.xlu0 %1344
  %1348 = vset.pattern.permute.xlu0 0
  %1349 = vperm.xlu0 %1348, %v811
  %v1350 = vpop.permute.xlu0 %1349
  %1353 = vset.pattern.permute.xlu0 0
  %1354 = vperm.xlu0 %1353, %v812
  %v1355 = vpop.permute.xlu0 %1354
  %1358 = vset.pattern.permute.xlu0 0
  %1359 = vperm.xlu0 %1358, %v813
  %v1360 = vpop.permute.xlu0 %1359
  %1363 = vset.pattern.permute.xlu0 0
  %1364 = vperm.xlu0 %1363, %v814
  %v1365 = vpop.permute.xlu0 %1364
  %1368 = vset.pattern.permute.xlu0 0
  %1369 = vperm.xlu0 %1368, %v815
  %v1370 = vpop.permute.xlu0 %1369
  %1373 = vset.pattern.permute.xlu0 0
  %1374 = vperm.xlu0 %1373, %v816
  %v1375 = vpop.permute.xlu0 %1374
  %1378 = vset.pattern.permute.xlu0 0
  %1379 = vperm.xlu0 %1378, %v817
  %v1380 = vpop.permute.xlu0 %1379
  %1383 = vset.pattern.permute.xlu0 0
  %1384 = vperm.xlu0 %1383, %v818
  %v1385 = vpop.permute.xlu0 %1384
  %1388 = vset.pattern.permute.xlu0 0
  %1389 = vperm.xlu0 %1388, %v819
  %v1390 = vpop.permute.xlu0 %1389
  %1393 = vset.pattern.permute.xlu0 0
  %1394 = vperm.xlu0 %1393, %v820
  %v1395 = vpop.permute.xlu0 %1394
  %1398 = vset.pattern.permute.xlu0 0
  %1399 = vperm.xlu0 %1398, %v821
  %v1400 = vpop.permute.xlu0 %1399
  %1403 = vset.pattern.permute.xlu0 0
  %1404 = vperm.xlu0 %1403, %v822
  %v1405 = vpop.permute.xlu0 %1404
  %1408 = vset.pattern.permute.xlu0 0
  %1409 = vperm.xlu0 %1408, %v823
  %v1410 = vpop.permute.xlu0 %1409
  %1413 = vset.pattern.permute.xlu0 0
  %1414 = vperm.xlu0 %1413, %v824
  %v1415 = vpop.permute.xlu0 %1414
  %1418 = vset.pattern.permute.xlu0 0
  %1419 = vperm.xlu0 %1418, %v825
  %v1420 = vpop.permute.xlu0 %1419
  %1423 = vset.pattern.permute.xlu0 0
  %1424 = vperm.xlu0 %1423, %v826
  %v1425 = vpop.permute.xlu0 %1424
  %1428 = vset.pattern.permute.xlu0 0
  %1429 = vperm.xlu0 %1428, %v827
  %v1430 = vpop.permute.xlu0 %1429
  %1433 = vset.pattern.permute.xlu0 0
  %1434 = vperm.xlu0 %1433, %v828
  %v1435 = vpop.permute.xlu0 %1434
  %1438 = vset.pattern.permute.xlu0 0
  %1439 = vperm.xlu0 %1438, %v829
  %v1440 = vpop.permute.xlu0 %1439
  %1443 = vset.pattern.permute.xlu0 0
  %1444 = vperm.xlu0 %1443, %v830
  %v1445 = vpop.permute.xlu0 %1444
  %1448 = vset.pattern.permute.xlu0 0
  %1449 = vperm.xlu0 %1448, %v831
  %v1450 = vpop.permute.xlu0 %1449
  %1453 = vset.pattern.permute.xlu0 0
  %1454 = vperm.xlu0 %1453, %v832
  %v1455 = vpop.permute.xlu0 %1454
  %1458 = vset.pattern.permute.xlu0 0
  %1459 = vperm.xlu0 %1458, %v833
  %v1460 = vpop.permute.xlu0 %1459
  %1463 = vset.pattern.permute.xlu0 0
  %1464 = vperm.xlu0 %1463, %v834
  %v1465 = vpop.permute.xlu0 %1464
  %1468 = vset.pattern.permute.xlu0 0
  %1469 = vperm.xlu0 %1468, %v835
  %v1470 = vpop.permute.xlu0 %1469
  %1473 = vset.pattern.permute.xlu0 0
  %1474 = vperm.xlu0 %1473, %v836
  %v1475 = vpop.permute.xlu0 %1474
  %1478 = vset.pattern.permute.xlu0 0
  %1479 = vperm.xlu0 %1478, %v837
  %v1480 = vpop.permute.xlu0 %1479
  %1483 = vset.pattern.permute.xlu0 0
  %1484 = vperm.xlu0 %1483, %v838
  %v1485 = vpop.permute.xlu0 %1484
  %1488 = vset.pattern.permute.xlu0 0
  %1489 = vperm.xlu0 %1488, %v839
  %v1490 = vpop.permute.xlu0 %1489
  %1493 = vset.pattern.permute.xlu0 0
  %1494 = vperm.xlu0 %1493, %v840
  %v1495 = vpop.permute.xlu0 %1494
  %1498 = vset.pattern.permute.xlu0 0
  %1499 = vperm.xlu0 %1498, %v841
  %v1500 = vpop.permute.xlu0 %1499
  %1503 = vset.pattern.permute.xlu0 0
  %1504 = vperm.xlu0 %1503, %v842
  %v1505 = vpop.permute.xlu0 %1504
  %1508 = vset.pattern.permute.xlu0 0
  %1509 = vperm.xlu0 %1508, %v843
  %v1510 = vpop.permute.xlu0 %1509
  %1513 = vset.pattern.permute.xlu0 0
  %1514 = vperm.xlu0 %1513, %v844
  %v1515 = vpop.permute.xlu0 %1514
  %1518 = vset.pattern.permute.xlu0 0
  %1519 = vperm.xlu0 %1518, %v845
  %v1520 = vpop.permute.xlu0 %1519
  %1523 = vset.pattern.permute.xlu0 0
  %1524 = vperm.xlu0 %1523, %v846
  %v1525 = vpop.permute.xlu0 %1524
  %1528 = vset.pattern.permute.xlu0 0
  %1529 = vperm.xlu0 %1528, %v847
  %v1530 = vpop.permute.xlu0 %1529
  %1533 = vset.pattern.permute.xlu0 0
  %1534 = vperm.xlu0 %1533, %v848
  %v1535 = vpop.permute.xlu0 %1534
  %1538 = vset.pattern.permute.xlu0 0
  %1539 = vperm.xlu0 %1538, %v849
  %v1540 = vpop.permute.xlu0 %1539
  %1543 = vset.pattern.permute.xlu0 0
  %1544 = vperm.xlu0 %1543, %v850
  %v1545 = vpop.permute.xlu0 %1544
  %1548 = vset.pattern.permute.xlu0 0
  %1549 = vperm.xlu0 %1548, %v851
  %v1550 = vpop.permute.xlu0 %1549
  %1553 = vset.pattern.permute.xlu0 0
  %1554 = vperm.xlu0 %1553, %v852
  %v1555 = vpop.permute.xlu0 %1554
  %1558 = vset.pattern.permute.xlu0 0
  %1559 = vperm.xlu0 %1558, %v853
  %v1560 = vpop.permute.xlu0 %1559
  %1563 = vset.pattern.permute.xlu0 0
  %1564 = vperm.xlu0 %1563, %v854
  %v1565 = vpop.permute.xlu0 %1564
  %1568 = vset.pattern.permute.xlu0 0
  %1569 = vperm.xlu0 %1568, %v855
  %v1570 = vpop.permute.xlu0 %1569
  %1573 = vset.pattern.permute.xlu0 0
  %1574 = vperm.xlu0 %1573, %v856
  %v1575 = vpop.permute.xlu0 %1574
  %1578 = vset.pattern.permute.xlu0 0
  %1579 = vperm.xlu0 %1578, %v857
  %v1580 = vpop.permute.xlu0 %1579
  %1583 = vset.pattern.permute.xlu0 0
  %1584 = vperm.xlu0 %1583, %v858
  %v1585 = vpop.permute.xlu0 %1584
  %1588 = vset.pattern.permute.xlu0 0
  %1589 = vperm.xlu0 %1588, %v859
  %v1590 = vpop.permute.xlu0 %1589
  %1593 = vset.pattern.permute.xlu0 0
  %1594 = vperm.xlu0 %1593, %v860
  %v1595 = vpop.permute.xlu0 %1594
  %1598 = vset.pattern.permute.xlu0 0
  %1599 = vperm.xlu0 %1598, %v861
  %v1600 = vpop.permute.xlu0 %1599
  %1603 = vset.pattern.permute.xlu0 0
  %1604 = vperm.xlu0 %1603, %v862
  %v1605 = vpop.permute.xlu0 %1604
  %1608 = vset.pattern.permute.xlu0 0
  %1609 = vperm.xlu0 %1608, %v863
  %v1610 = vpop.permute.xlu0 %1609
  %1613 = vset.pattern.permute.xlu0 0
  %1614 = vperm.xlu0 %1613, %v864
  %v1615 = vpop.permute.xlu0 %1614
  %1618 = vset.pattern.permute.xlu0 0
  %1619 = vperm.xlu0 %1618, %v865
  %v1620 = vpop.permute.xlu0 %1619
  %1623 = vset.pattern.permute.xlu0 0
  %1624 = vperm.xlu0 %1623, %v866
  %v1625 = vpop.permute.xlu0 %1624
  %1628 = vset.pattern.permute.xlu0 0
  %1629 = vperm.xlu0 %1628, %v867
  %v1630 = vpop.permute.xlu0 %1629
  %1633 = vset.pattern.permute.xlu0 0
  %1634 = vperm.xlu0 %1633, %v868
  %v1635 = vpop.permute.xlu0 %1634
  %1638 = vset.pattern.permute.xlu0 0
  %1639 = vperm.xlu0 %1638, %v869
  %v1640 = vpop.permute.xlu0 %1639
  %1643 = vset.pattern.permute.xlu0 0
  %1644 = vperm.xlu0 %1643, %v870
  %v1645 = vpop.permute.xlu0 %1644
  %1648 = vset.pattern.permute.xlu0 0
  %1649 = vperm.xlu0 %1648, %v871
  %v1650 = vpop.permute.xlu0 %1649
  %1653 = vset.pattern.permute.xlu0 0
  %1654 = vperm.xlu0 %1653, %v872
  %v1655 = vpop.permute.xlu0 %1654
  %1658 = vset.pattern.permute.xlu0 0
  %1659 = vperm.xlu0 %1658, %v873
  %v1660 = vpop.permute.xlu0 %1659
  %1663 = vset.pattern.permute.xlu0 0
  %1664 = vperm.xlu0 %1663, %v874
  %v1665 = vpop.permute.xlu0 %1664
  %1668 = vset.pattern.permute.xlu0 0
  %1669 = vperm.xlu0 %1668, %v875
  %v1670 = vpop.permute.xlu0 %1669
  %1673 = vset.pattern.permute.xlu0 0
  %1674 = vperm.xlu0 %1673, %v876
  %v1675 = vpop.permute.xlu0 %1674
  %1678 = vset.pattern.permute.xlu0 0
  %1679 = vperm.xlu0 %1678, %v877
  %v1680 = vpop.permute.xlu0 %1679
  %1683 = vset.pattern.permute.xlu0 0
  %1684 = vperm.xlu0 %1683, %v878
  %v1685 = vpop.permute.xlu0 %1684
  %1688 = vset.pattern.permute.xlu0 0
  %1689 = vperm.xlu0 %1688, %v879
  %v1690 = vpop.permute.xlu0 %1689
  %1693 = vset.pattern.permute.xlu0 0
  %1694 = vperm.xlu0 %1693, %v880
  %v1695 = vpop.permute.xlu0 %1694
  %1698 = vset.pattern.permute.xlu0 0
  %1699 = vperm.xlu0 %1698, %v881
  %v1700 = vpop.permute.xlu0 %1699
  %1703 = vset.pattern.permute.xlu0 0
  %1704 = vperm.xlu0 %1703, %v882
  %v1705 = vpop.permute.xlu0 %1704
  %1708 = vset.pattern.permute.xlu0 0
  %1709 = vperm.xlu0 %1708, %v883
  %v1710 = vpop.permute.xlu0 %1709
  %1713 = vset.pattern.permute.xlu0 0
  %1714 = vperm.xlu0 %1713, %v884
  %v1715 = vpop.permute.xlu0 %1714
  %1718 = vset.pattern.permute.xlu0 0
  %1719 = vperm.xlu0 %1718, %v885
  %v1720 = vpop.permute.xlu0 %1719
  %1723 = vset.pattern.permute.xlu0 0
  %1724 = vperm.xlu0 %1723, %v886
  %v1725 = vpop.permute.xlu0 %1724
  %1728 = vset.pattern.permute.xlu0 0
  %1729 = vperm.xlu0 %1728, %v887
  %v1730 = vpop.permute.xlu0 %1729
  %1733 = vset.pattern.permute.xlu0 0
  %1734 = vperm.xlu0 %1733, %v888
  %v1735 = vpop.permute.xlu0 %1734
  %1738 = vset.pattern.permute.xlu0 0
  %1739 = vperm.xlu0 %1738, %v889
  %v1740 = vpop.permute.xlu0 %1739
  %1743 = vset.pattern.permute.xlu0 0
  %1744 = vperm.xlu0 %1743, %v890
  %v1745 = vpop.permute.xlu0 %1744
  %1748 = vset.pattern.permute.xlu0 0
  %1749 = vperm.xlu0 %1748, %v891
  %v1750 = vpop.permute.xlu0 %1749
  %1753 = vset.pattern.permute.xlu0 0
  %1754 = vperm.xlu0 %1753, %v892
  %v1755 = vpop.permute.xlu0 %1754
  %1758 = vset.pattern.permute.xlu0 0
  %1759 = vperm.xlu0 %1758, %v893
  %v1760 = vpop.permute.xlu0 %1759
  %1763 = vset.pattern.permute.xlu0 0
  %1764 = vperm.xlu0 %1763, %v894
  %v1765 = vpop.permute.xlu0 %1764
  %1768 = vset.pattern.permute.xlu0 0
  %1769 = vperm.xlu0 %1768, %v895
  %v1770 = vpop.permute.xlu0 %1769
  %1773 = vset.pattern.permute.xlu0 0
  %1774 = vperm.xlu0 %1773, %v896
  %v1775 = vpop.permute.xlu0 %1774
  %1778 = vset.pattern.permute.xlu0 0
  %1779 = vperm.xlu0 %1778, %v897
  %v1780 = vpop.permute.xlu0 %1779
  %1783 = vset.pattern.permute.xlu0 0
  %1784 = vperm.xlu0 %1783, %v898
  %v1785 = vpop.permute.xlu0 %1784
  %1788 = vset.pattern.permute.xlu0 0
  %1789 = vperm.xlu0 %1788, %v899
  %v1790 = vpop.permute.xlu0 %1789
  %1793 = vset.pattern.permute.xlu0 0
  %1794 = vperm.xlu0 %1793, %v900
  %v1795 = vpop.permute.xlu0 %1794
  %1798 = vset.pattern.permute.xlu0 0
  %1799 = vperm.xlu0 %1798, %v901
  %v1800 = vpop.permute.xlu0 %1799
  %1803 = vset.pattern.permute.xlu0 0
  %1804 = vperm.xlu0 %1803, %v902
  %v1805 = vpop.permute.xlu0 %1804
  %1808 = vset.pattern.permute.xlu0 0
  %1809 = vperm.xlu0 %1808, %v903
  %v1810 = vpop.permute.xlu0 %1809
  %1813 = vset.pattern.permute.xlu0 0
  %1814 = vperm.xlu0 %1813, %v904
  %v1815 = vpop.permute.xlu0 %1814
  %1818 = vset.pattern.permute.xlu0 0
  %1819 = vperm.xlu0 %1818, %v905
  %v1820 = vpop.permute.xlu0 %1819
  %1823 = vset.pattern.permute.xlu0 0
  %1824 = vperm.xlu0 %1823, %v906
  %v1825 = vpop.permute.xlu0 %1824
  %1828 = vset.pattern.permute.xlu0 0
  %1829 = vperm.xlu0 %1828, %v907
  %v1830 = vpop.permute.xlu0 %1829
  %1833 = vset.pattern.permute.xlu0 0
  %1834 = vperm.xlu0 %1833, %v908
  %v1835 = vpop.permute.xlu0 %1834
  %1838 = vset.pattern.permute.xlu0 0
  %1839 = vperm.xlu0 %1838, %v909
  %v1840 = vpop.permute.xlu0 %1839
  %1843 = vset.pattern.permute.xlu0 0
  %1844 = vperm.xlu0 %1843, %v910
  %v1845 = vpop.permute.xlu0 %1844
  %1848 = vset.pattern.permute.xlu0 0
  %1849 = vperm.xlu0 %1848, %v911
  %v1850 = vpop.permute.xlu0 %1849
  %1853 = vset.pattern.permute.xlu0 0
  %1854 = vperm.xlu0 %1853, %v912
  %v1855 = vpop.permute.xlu0 %1854
  %1858 = vset.pattern.permute.xlu0 0
  %1859 = vperm.xlu0 %1858, %v913
  %v1860 = vpop.permute.xlu0 %1859
  %1863 = vset.pattern.permute.xlu0 0
  %1864 = vperm.xlu0 %1863, %v914
  %v1865 = vpop.permute.xlu0 %1864
  %1868 = vset.pattern.permute.xlu0 0
  %1869 = vperm.xlu0 %1868, %v915
  %v1870 = vpop.permute.xlu0 %1869
  %1873 = vset.pattern.permute.xlu0 0
  %1874 = vperm.xlu0 %1873, %v916
  %v1875 = vpop.permute.xlu0 %1874
  %1878 = vset.pattern.permute.xlu0 0
  %1879 = vperm.xlu0 %1878, %v917
  %v1880 = vpop.permute.xlu0 %1879
  %1883 = vset.pattern.permute.xlu0 0
  %1884 = vperm.xlu0 %1883, %v918
  %v1885 = vpop.permute.xlu0 %1884
  %1888 = vset.pattern.permute.xlu0 0
  %1889 = vperm.xlu0 %1888, %v919
  %v1890 = vpop.permute.xlu0 %1889
  %1893 = vset.pattern.permute.xlu0 0
  %1894 = vperm.xlu0 %1893, %v920
  %v1895 = vpop.permute.xlu0 %1894
  %1898 = vset.pattern.permute.xlu0 0
  %1899 = vperm.xlu0 %1898, %v921
  %v1900 = vpop.permute.xlu0 %1899
  %1903 = vset.pattern.permute.xlu0 0
  %1904 = vperm.xlu0 %1903, %v922
  %v1905 = vpop.permute.xlu0 %1904
  %1908 = vset.pattern.permute.xlu0 0
  %1909 = vperm.xlu0 %1908, %v923
  %v1910 = vpop.permute.xlu0 %1909
  %1913 = vset.pattern.permute.xlu0 0
  %1914 = vperm.xlu0 %1913, %v924
  %v1915 = vpop.permute.xlu0 %1914
  %1918 = vset.pattern.permute.xlu0 0
  %1919 = vperm.xlu0 %1918, %v925
  %v1920 = vpop.permute.xlu0 %1919
  %1923 = vset.pattern.permute.xlu0 0
  %1924 = vperm.xlu0 %1923, %v926
  %v1925 = vpop.permute.xlu0 %1924
  %1928 = vset.pattern.permute.xlu0 0
  %1929 = vperm.xlu0 %1928, %v927
  %v1930 = vpop.permute.xlu0 %1929
  %1933 = vset.pattern.permute.xlu0 0
  %1934 = vperm.xlu0 %1933, %v928
  %v1935 = vpop.permute.xlu0 %1934
  %1938 = vset.pattern.permute.xlu0 0
  %1939 = vperm.xlu0 %1938, %v929
  %v1940 = vpop.permute.xlu0 %1939
  %1943 = vset.pattern.permute.xlu0 0
  %1944 = vperm.xlu0 %1943, %v930
  %v1945 = vpop.permute.xlu0 %1944
  %1948 = vset.pattern.permute.xlu0 0
  %1949 = vperm.xlu0 %1948, %v931
  %v1950 = vpop.permute.xlu0 %1949
  %1953 = vset.pattern.permute.xlu0 0
  %1954 = vperm.xlu0 %1953, %v932
  %v1955 = vpop.permute.xlu0 %1954
  %1958 = vset.pattern.permute.xlu0 0
  %1959 = vperm.xlu0 %1958, %v933
  %v1960 = vpop.permute.xlu0 %1959
  %1963 = vset.pattern.permute.xlu0 0
  %1964 = vperm.xlu0 %1963, %v934
  %v1965 = vpop.permute.xlu0 %1964
  %1968 = vset.pattern.permute.xlu0 0
  %1969 = vperm.xlu0 %1968, %v935
  %v1970 = vpop.permute.xlu0 %1969
  %1973 = vset.pattern.permute.xlu0 0
  %1974 = vperm.xlu0 %1973, %v936
  %v1975 = vpop.permute.xlu0 %1974
  %1978 = vset.pattern.permute.xlu0 0
  %1979 = vperm.xlu0 %1978, %v937
  %v1980 = vpop.permute.xlu0 %1979
  %1983 = vset.pattern.permute.xlu0 0
  %1984 = vperm.xlu0 %1983, %v938
  %v1985 = vpop.permute.xlu0 %1984
  %1988 = vset.pattern.permute.xlu0 0
  %1989 = vperm.xlu0 %1988, %v939
  %v1990 = vpop.permute.xlu0 %1989
  %1993 = vset.pattern.permute.xlu0 0
  %1994 = vperm.xlu0 %1993, %v940
  %v1995 = vpop.permute.xlu0 %1994
  %1998 = vset.pattern.permute.xlu0 0
  %1999 = vperm.xlu0 %1998, %v941
  %v2000 = vpop.permute.xlu0 %1999
  %2003 = vset.pattern.permute.xlu0 0
  %2004 = vperm.xlu0 %2003, %v942
  %v2005 = vpop.permute.xlu0 %2004
  %2008 = vset.pattern.permute.xlu0 0
  %2009 = vperm.xlu0 %2008, %v943
  %v2010 = vpop.permute.xlu0 %2009
  %2013 = vset.pattern.permute.xlu0 0
  %2014 = vperm.xlu0 %2013, %v944
  %v2015 = vpop.permute.xlu0 %2014
  %2018 = vset.pattern.permute.xlu0 0
  %2019 = vperm.xlu0 %2018, %v945
  %v2020 = vpop.permute.xlu0 %2019
  %2023 = vset.pattern.permute.xlu0 0
  %2024 = vperm.xlu0 %2023, %v946
  %v2025 = vpop.permute.xlu0 %2024
  %2028 = vset.pattern.permute.xlu0 0
  %2029 = vperm.xlu0 %2028, %v947
  %v2030 = vpop.permute.xlu0 %2029
  %2033 = vset.pattern.permute.xlu0 0
  %2034 = vperm.xlu0 %2033, %v948
  %v2035 = vpop.permute.xlu0 %2034
  %2038 = vset.pattern.permute.xlu0 0
  %2039 = vperm.xlu0 %2038, %v949
  %v2040 = vpop.permute.xlu0 %2039
  %2043 = vset.pattern.permute.xlu0 0
  %2044 = vperm.xlu0 %2043, %v950
  %v2045 = vpop.permute.xlu0 %2044
  %2048 = vset.pattern.permute.xlu0 0
  %2049 = vperm.xlu0 %2048, %v951
  %v2050 = vpop.permute.xlu0 %2049
  %2053 = vset.pattern.permute.xlu0 0
  %2054 = vperm.xlu0 %2053, %v952
  %v2055 = vpop.permute.xlu0 %2054
  %2058 = vset.pattern.permute.xlu0 0
  %2059 = vperm.xlu0 %2058, %v953
  %v2060 = vpop.permute.xlu0 %2059
  %2063 = vset.pattern.permute.xlu0 0
  %2064 = vperm.xlu0 %2063, %v954
  %v2065 = vpop.permute.xlu0 %2064
  %2068 = vset.pattern.permute.xlu0 0
  %2069 = vperm.xlu0 %2068, %v955
  %v2070 = vpop.permute.xlu0 %2069
  %2073 = vset.pattern.permute.xlu0 0
  %2074 = vperm.xlu0 %2073, %v956
  %v2075 = vpop.permute.xlu0 %2074
  %2078 = vset.pattern.permute.xlu0 0
  %2079 = vperm.xlu0 %2078, %v957
  %v2080 = vpop.permute.xlu0 %2079
  %2083 = vset.pattern.permute.xlu0 0
  %2084 = vperm.xlu0 %2083, %v958
  %v2085 = vpop.permute.xlu0 %2084
  %2088 = vset.pattern.permute.xlu0 0
  %2089 = vperm.xlu0 %2088, %v959
  %v2090 = vpop.permute.xlu0 %2089
  %2093 = vset.pattern.permute.xlu0 0
  %2094 = vperm.xlu0 %2093, %v960
  %v2095 = vpop.permute.xlu0 %2094
  %2098 = vset.pattern.permute.xlu0 0
  %2099 = vperm.xlu0 %2098, %v961
  %v2100 = vpop.permute.xlu0 %2099
  %2103 = vset.pattern.permute.xlu0 0
  %2104 = vperm.xlu0 %2103, %v962
  %v2105 = vpop.permute.xlu0 %2104
  %2108 = vset.pattern.permute.xlu0 0
  %2109 = vperm.xlu0 %2108, %v963
  %v2110 = vpop.permute.xlu0 %2109
  %2113 = vset.pattern.permute.xlu0 0
  %2114 = vperm.xlu0 %2113, %v964
  %v2115 = vpop.permute.xlu0 %2114
  %2118 = vset.pattern.permute.xlu0 0
  %2119 = vperm.xlu0 %2118, %v965
  %v2120 = vpop.permute.xlu0 %2119
  %2123 = vset.pattern.permute.xlu0 0
  %2124 = vperm.xlu0 %2123, %v966
  %v2125 = vpop.permute.xlu0 %2124
  %2128 = vset.pattern.permute.xlu0 0
  %2129 = vperm.xlu0 %2128, %v967
  %v2130 = vpop.permute.xlu0 %2129
  %2133 = vset.pattern.permute.xlu0 0
  %2134 = vperm.xlu0 %2133, %v968
  %v2135 = vpop.permute.xlu0 %2134
  %2138 = vset.pattern.permute.xlu0 0
  %2139 = vperm.xlu0 %2138, %v969
  %v2140 = vpop.permute.xlu0 %2139
  %2143 = vset.pattern.permute.xlu0 0
  %2144 = vperm.xlu0 %2143, %v970
  %v2145 = vpop.permute.xlu0 %2144
  %2148 = vset.pattern.permute.xlu0 0
  %2149 = vperm.xlu0 %2148, %v971
  %v2150 = vpop.permute.xlu0 %2149
  %2153 = vset.pattern.permute.xlu0 0
  %2154 = vperm.xlu0 %2153, %v972
  %v2155 = vpop.permute.xlu0 %2154
  %2158 = vset.pattern.permute.xlu0 0
  %2159 = vperm.xlu0 %2158, %v973
  %v2160 = vpop.permute.xlu0 %2159
  %2163 = vset.pattern.permute.xlu0 0
  %2164 = vperm.xlu0 %2163, %v974
  %v2165 = vpop.permute.xlu0 %2164
  %2168 = vset.pattern.permute.xlu0 0
  %2169 = vperm.xlu0 %2168, %v975
  %v2170 = vpop.permute.xlu0 %2169
  %2173 = vset.pattern.permute.xlu0 0
  %2174 = vperm.xlu0 %2173, %v976
  %v2175 = vpop.permute.xlu0 %2174
  %2178 = vset.pattern.permute.xlu0 0
  %2179 = vperm.xlu0 %2178, %v977
  %v2180 = vpop.permute.xlu0 %2179
  %2183 = vset.pattern.permute.xlu0 0
  %2184 = vperm.xlu0 %2183, %v978
  %v2185 = vpop.permute.xlu0 %2184
  %2188 = vset.pattern.permute.xlu0 0
  %2189 = vperm.xlu0 %2188, %v979
  %v2190 = vpop.permute.xlu0 %2189
  %2193 = vset.pattern.permute.xlu0 0
  %2194 = vperm.xlu0 %2193, %v980
  %v2195 = vpop.permute.xlu0 %2194
  %2198 = vset.pattern.permute.xlu0 0
  %2199 = vperm.xlu0 %2198, %v981
  %v2200 = vpop.permute.xlu0 %2199
  %2203 = vset.pattern.permute.xlu0 0
  %2204 = vperm.xlu0 %2203, %v982
  %v2205 = vpop.permute.xlu0 %2204
  %2208 = vset.pattern.permute.xlu0 0
  %2209 = vperm.xlu0 %2208, %v983
  %v2210 = vpop.permute.xlu0 %2209
  %2213 = vset.pattern.permute.xlu0 0
  %2214 = vperm.xlu0 %2213, %v984
  %v2215 = vpop.permute.xlu0 %2214
  %2218 = vset.pattern.permute.xlu0 0
  %2219 = vperm.xlu0 %2218, %v985
  %v2220 = vpop.permute.xlu0 %2219
  %2223 = vset.pattern.permute.xlu0 0
  %2224 = vperm.xlu0 %2223, %v986
  %v2225 = vpop.permute.xlu0 %2224
  %2228 = vset.pattern.permute.xlu0 0
  %2229 = vperm.xlu0 %2228, %v987
  %v2230 = vpop.permute.xlu0 %2229
  %2233 = vset.pattern.permute.xlu0 0
  %2234 = vperm.xlu0 %2233, %v988
  %v2235 = vpop.permute.xlu0 %2234
  %2238 = vset.pattern.permute.xlu0 0
  %2239 = vperm.xlu0 %2238, %v989
  %v2240 = vpop.permute.xlu0 %2239
  %2243 = vset.pattern.permute.xlu0 0
  %2244 = vperm.xlu0 %2243, %v990
  %v2245 = vpop.permute.xlu0 %2244
  %2248 = vset.pattern.permute.xlu0 0
  %2249 = vperm.xlu0 %2248, %v991
  %v2250 = vpop.permute.xlu0 %2249
  %2253 = vset.pattern.permute.xlu0 0
  %2254 = vperm.xlu0 %2253, %v992
  %v2255 = vpop.permute.xlu0 %2254
  %2258 = vset.pattern.permute.xlu0 0
  %2259 = vperm.xlu0 %2258, %v993
  %v2260 = vpop.permute.xlu0 %2259
  %2263 = vset.pattern.permute.xlu0 0
  %2264 = vperm.xlu0 %2263, %v994
  %v2265 = vpop.permute.xlu0 %2264
  %2268 = vset.pattern.permute.xlu0 0
  %2269 = vperm.xlu0 %2268, %v995
  %v2270 = vpop.permute.xlu0 %2269
  %2273 = vset.pattern.permute.xlu0 0
  %2274 = vperm.xlu0 %2273, %v996
  %v2275 = vpop.permute.xlu0 %2274
  %2278 = vset.pattern.permute.xlu0 0
  %2279 = vperm.xlu0 %2278, %v997
  %v2280 = vpop.permute.xlu0 %2279
  %2283 = vset.pattern.permute.xlu0 0
  %2284 = vperm.xlu0 %2283, %v998
  %v2285 = vpop.permute.xlu0 %2284
  %2288 = vset.pattern.permute.xlu0 0
  %2289 = vperm.xlu0 %2288, %v999
  %v2290 = vpop.permute.xlu0 %2289
  %2293 = vset.pattern.permute.xlu0 0
  %2294 = vperm.xlu0 %2293, %v1000
  %v2295 = vpop.permute.xlu0 %2294
  %2298 = vset.pattern.permute.xlu0 0
  %2299 = vperm.xlu0 %2298, %v1001
  %v2300 = vpop.permute.xlu0 %2299
  %2303 = vset.pattern.permute.xlu0 0
  %2304 = vperm.xlu0 %2303, %v1002
  %v2305 = vpop.permute.xlu0 %2304
  %2308 = vset.pattern.permute.xlu0 0
  %2309 = vperm.xlu0 %2308, %v1003
  %v2310 = vpop.permute.xlu0 %2309
  %2313 = vset.pattern.permute.xlu0 0
  %2314 = vperm.xlu0 %2313, %v1004
  %v2315 = vpop.permute.xlu0 %2314
  %2318 = vset.pattern.permute.xlu0 0
  %2319 = vperm.xlu0 %2318, %v1005
  %v2320 = vpop.permute.xlu0 %2319
  %2323 = vset.pattern.permute.xlu0 0
  %2324 = vperm.xlu0 %2323, %v1006
  %v2325 = vpop.permute.xlu0 %2324
  %2328 = vset.pattern.permute.xlu0 0
  %2329 = vperm.xlu0 %2328, %v1007
  %v2330 = vpop.permute.xlu0 %2329
  %2333 = vset.pattern.permute.xlu0 0
  %2334 = vperm.xlu0 %2333, %v1008
  %v2335 = vpop.permute.xlu0 %2334
  %2338 = vset.pattern.permute.xlu0 0
  %2339 = vperm.xlu0 %2338, %v1009
  %v2340 = vpop.permute.xlu0 %2339
  %2343 = vset.pattern.permute.xlu0 0
  %2344 = vperm.xlu0 %2343, %v1010
  %v2345 = vpop.permute.xlu0 %2344
  %2348 = vset.pattern.permute.xlu0 0
  %2349 = vperm.xlu0 %2348, %v1011
  %v2350 = vpop.permute.xlu0 %2349
  %2353 = vset.pattern.permute.xlu0 0
  %2354 = vperm.xlu0 %2353, %v1012
  %v2355 = vpop.permute.xlu0 %2354
  %2358 = vset.pattern.permute.xlu0 0
  %2359 = vperm.xlu0 %2358, %v1013
  %v2360 = vpop.permute.xlu0 %2359
  %2363 = vset.pattern.permute.xlu0 0
  %2364 = vperm.xlu0 %2363, %v1014
  %v2365 = vpop.permute.xlu0 %2364
  %2368 = vset.pattern.permute.xlu0 0
  %2369 = vperm.xlu0 %2368, %v1015
  %v2370 = vpop.permute.xlu0 %2369
  %2373 = vset.pattern.permute.xlu0 0
  %2374 = vperm.xlu0 %2373, %v1016
  %v2375 = vpop.permute.xlu0 %2374
  %2378 = vset.pattern.permute.xlu0 0
  %2379 = vperm.xlu0 %2378, %v1017
  %v2380 = vpop.permute.xlu0 %2379
  %2383 = vset.pattern.permute.xlu0 0
  %2384 = vperm.xlu0 %2383, %v1018
  %v2385 = vpop.permute.xlu0 %2384
  %2388 = vset.pattern.permute.xlu0 0
  %2389 = vperm.xlu0 %2388, %v1019
  %v2390 = vpop.permute.xlu0 %2389
  %2393 = vset.pattern.permute.xlu0 0
  %2394 = vperm.xlu0 %2393, %v1020
  %v2395 = vpop.permute.xlu0 %2394
  %2398 = vset.pattern.permute.xlu0 0
  %2399 = vperm.xlu0 %2398, %v1021
  %v2400 = vpop.permute.xlu0 %2399
  %2403 = vset.pattern.permute.xlu0 0
  %2404 = vperm.xlu0 %2403, %v1022
  %v2405 = vpop.permute.xlu0 %2404
  %2408 = vset.pattern.permute.xlu0 0
  %2409 = vperm.xlu0 %2408, %v1023
  %v2410 = vpop.permute.xlu0 %2409
  %2413 = vset.pattern.permute.xlu0 0
  %2414 = vperm.xlu0 %2413, %v1024
  %v2415 = vpop.permute.xlu0 %2414
  %2418 = vset.pattern.permute.xlu0 0
  %2419 = vperm.xlu0 %2418, %v1025
  %v2420 = vpop.permute.xlu0 %2419
  %2423 = vset.pattern.permute.xlu0 0
  %2424 = vperm.xlu0 %2423, %v1026
  %v2425 = vpop.permute.xlu0 %2424
  %2428 = vset.pattern.permute.xlu0 0
  %2429 = vperm.xlu0 %2428, %v1027
  %v2430 = vpop.permute.xlu0 %2429
  %2433 = vset.pattern.permute.xlu0 0
  %2434 = vperm.xlu0 %2433, %v1028
  %v2435 = vpop.permute.xlu0 %2434
  %2438 = vset.pattern.permute.xlu0 0
  %2439 = vperm.xlu0 %2438, %v1029
  %v2440 = vpop.permute.xlu0 %2439
  %2443 = vset.pattern.permute.xlu0 0
  %2444 = vperm.xlu0 %2443, %v1030
  %v2445 = vpop.permute.xlu0 %2444
  %2448 = vset.pattern.permute.xlu0 0
  %2449 = vperm.xlu0 %2448, %v1031
  %v2450 = vpop.permute.xlu0 %2449
  %2453 = vset.pattern.permute.xlu0 0
  %2454 = vperm.xlu0 %2453, %v1032
  %v2455 = vpop.permute.xlu0 %2454
  %2458 = vset.pattern.permute.xlu0 0
  %2459 = vperm.xlu0 %2458, %v1033
  %v2460 = vpop.permute.xlu0 %2459
  %2463 = vset.pattern.permute.xlu0 0
  %2464 = vperm.xlu0 %2463, %v1034
  %v2465 = vpop.permute.xlu0 %2464
  %2468 = vset.pattern.permute.xlu0 0
  %2469 = vperm.xlu0 %2468, %v1035
  %v2470 = vpop.permute.xlu0 %2469
  %2473 = vset.pattern.permute.xlu0 0
  %2474 = vperm.xlu0 %2473, %v1036
  %v2475 = vpop.permute.xlu0 %2474
  %2478 = vset.pattern.permute.xlu0 0
  %2479 = vperm.xlu0 %2478, %v1037
  %v2480 = vpop.permute.xlu0 %2479
  %2483 = vset.pattern.permute.xlu0 0
  %2484 = vperm.xlu0 %2483, %v1038
  %v2485 = vpop.permute.xlu0 %2484
  %2488 = vset.pattern.permute.xlu0 0
  %2489 = vperm.xlu0 %2488, %v1039
  %v2490 = vpop.permute.xlu0 %2489
  %2493 = vset.pattern.permute.xlu0 0
  %2494 = vperm.xlu0 %2493, %v1040
  %v2495 = vpop.permute.xlu0 %2494
  %2498 = vset.pattern.permute.xlu0 0
  %2499 = vperm.xlu0 %2498, %v1041
  %v2500 = vpop.permute.xlu0 %2499
  %2503 = vset.pattern.permute.xlu0 0
  %2504 = vperm.xlu0 %2503, %v1042
  %v2505 = vpop.permute.xlu0 %2504
  %2508 = vset.pattern.permute.xlu0 0
  %2509 = vperm.xlu0 %2508, %v1043
  %v2510 = vpop.permute.xlu0 %2509
  %2513 = vset.pattern.permute.xlu0 0
  %2514 = vperm.xlu0 %2513, %v1044
  %v2515 = vpop.permute.xlu0 %2514
  %2518 = vset.pattern.permute.xlu0 0
  %2519 = vperm.xlu0 %2518, %v1045
  %v2520 = vpop.permute.xlu0 %2519
  %2523 = vset.pattern.permute.xlu0 0
  %2524 = vperm.xlu0 %2523, %v1046
  %v2525 = vpop.permute.xlu0 %2524
  %2528 = vset.pattern.permute.xlu0 0
  %2529 = vperm.xlu0 %2528, %v1047
  %v2530 = vpop.permute.xlu0 %2529
  %2533 = vset.pattern.permute.xlu0 0
  %2534 = vperm.xlu0 %2533, %v1048
  %v2535 = vpop.permute.xlu0 %2534
  %2538 = vset.pattern.permute.xlu0 0
  %2539 = vperm.xlu0 %2538, %v1049
  %v2540 = vpop.permute.xlu0 %2539
  %2543 = vset.pattern.permute.xlu0 0
  %2544 = vperm.xlu0 %2543, %v1050
  %v2545 = vpop.permute.xlu0 %2544
  %2548 = vset.pattern.permute.xlu0 0
  %2549 = vperm.xlu0 %2548, %v1051
  %v2550 = vpop.permute.xlu0 %2549
  %2553 = vset.pattern.permute.xlu0 0
  %2554 = vperm.xlu0 %2553, %v1052
  %v2555 = vpop.permute.xlu0 %2554
  %2558 = vset.pattern.permute.xlu0 0
  %2559 = vperm.xlu0 %2558, %v1053
  %v2560 = vpop.permute.xlu0 %2559
  %2563 = vset.pattern.permute.xlu0 0
  %2564 = vperm.xlu0 %2563, %v1054
  %v2565 = vpop.permute.xlu0 %2564
  %2568 = vset.pattern.permute.xlu0 0
  %2569 = vperm.xlu0 %2568, %v1055
  %v2570 = vpop.permute.xlu0 %2569
  %2573 = vset.pattern.permute.xlu0 0
  %2574 = vperm.xlu0 %2573, %v1056
  %v2575 = vpop.permute.xlu0 %2574
  %2578 = vset.pattern.permute.xlu0 0
  %2579 = vperm.xlu0 %2578, %v1057
  %v2580 = vpop.permute.xlu0 %2579
  %2583 = vset.pattern.permute.xlu0 0
  %2584 = vperm.xlu0 %2583, %v1058
  %v2585 = vpop.permute.xlu0 %2584
  %2588 = vset.pattern.permute.xlu0 0
  %2589 = vperm.xlu0 %2588, %v1059
  %v2590 = vpop.permute.xlu0 %2589
  %2593 = vset.pattern.permute.xlu0 0
  %2594 = vperm.xlu0 %2593, %v1060
  %v2595 = vpop.permute.xlu0 %2594
  %2598 = vset.pattern.permute.xlu0 0
  %2599 = vperm.xlu0 %2598, %v1061
  %v2600 = vpop.permute.xlu0 %2599
  %2603 = vset.pattern.permute.xlu0 0
  %2604 = vperm.xlu0 %2603, %v1062
  %v2605 = vpop.permute.xlu0 %2604
  %2608 = vset.pattern.permute.xlu0 0
  %2609 = vperm.xlu0 %2608, %v1063
  %v2610 = vpop.permute.xlu0 %2609
  %2613 = vset.pattern.permute.xlu0 0
  %2614 = vperm.xlu0 %2613, %v1064
  %v2615 = vpop.permute.xlu0 %2614
  %2618 = vset.pattern.permute.xlu0 0
  %2619 = vperm.xlu0 %2618, %v1065
  %v2620 = vpop.permute.xlu0 %2619
  %2623 = vset.pattern.permute.xlu0 0
  %2624 = vperm.xlu0 %2623, %v1066
  %v2625 = vpop.permute.xlu0 %2624
  %2628 = vset.pattern.permute.xlu0 0
  %2629 = vperm.xlu0 %2628, %v1067
  %v2630 = vpop.permute.xlu0 %2629
  %2633 = vset.pattern.permute.xlu0 0
  %2634 = vperm.xlu0 %2633, %v1068
  %v2635 = vpop.permute.xlu0 %2634
  %2638 = vset.pattern.permute.xlu0 0
  %2639 = vperm.xlu0 %2638, %v1069
  %v2640 = vpop.permute.xlu0 %2639
  %2643 = vset.pattern.permute.xlu0 0
  %2644 = vperm.xlu0 %2643, %v1070
  %v2645 = vpop.permute.xlu0 %2644
  %2648 = vset.pattern.permute.xlu0 0
  %2649 = vperm.xlu0 %2648, %v1071
  %v2650 = vpop.permute.xlu0 %2649
  %2653 = vset.pattern.permute.xlu0 0
  %2654 = vperm.xlu0 %2653, %v1072
  %v2655 = vpop.permute.xlu0 %2654
  %2658 = vset.pattern.permute.xlu0 0
  %2659 = vperm.xlu0 %2658, %v1073
  %v2660 = vpop.permute.xlu0 %2659
  %2663 = vset.pattern.permute.xlu0 0
  %2664 = vperm.xlu0 %2663, %v1074
  %v2665 = vpop.permute.xlu0 %2664
  %2668 = vset.pattern.permute.xlu0 0
  %2669 = vperm.xlu0 %2668, %v1075
  %v2670 = vpop.permute.xlu0 %2669
  %2673 = vset.pattern.permute.xlu0 0
  %2674 = vperm.xlu0 %2673, %v1076
  %v2675 = vpop.permute.xlu0 %2674
  %vm2677 = vcmask 80896
  %2678 = vst.msk [vmem:[%s4] sm:$0xff] %vm2677, %v1080
  %vm2679 = vcmask 74752
  %2680 = vst.msk [vmem:[%s4 + $0x8] sm:$0x3] %vm2679, %v1085
  %2681 = vst.msk [vmem:[%s4 + $0x10] sm:$0xff] %vm2677, %v1090
  %2682 = vst.msk [vmem:[%s4 + $0x18] sm:$0x3] %vm2679, %v1095
  %2683 = vst.msk [vmem:[%s4 + $0x20] sm:$0xff] %vm2677, %v1100
  %2684 = vst.msk [vmem:[%s4 + $0x28] sm:$0x3] %vm2679, %v1105
  %2685 = vst.msk [vmem:[%s4 + $0x30] sm:$0xff] %vm2677, %v1110
  %2686 = vst.msk [vmem:[%s4 + $0x38] sm:$0x3] %vm2679, %v1115
  %2687 = vst.msk [vmem:[%s4 + $0x40] sm:$0xff] %vm2677, %v1120
  %2688 = vst.msk [vmem:[%s4 + $0x48] sm:$0x3] %vm2679, %v1125
  %2689 = vst.msk [vmem:[%s4 + $0x50] sm:$0xff] %vm2677, %v1130
  %2690 = vst.msk [vmem:[%s4 + $0x58] sm:$0x3] %vm2679, %v1135
  %2691 = vst.msk [vmem:[%s4 + $0x60] sm:$0xff] %vm2677, %v1140
  %2692 = vst.msk [vmem:[%s4 + $0x68] sm:$0x3] %vm2679, %v1145
  %2693 = vst.msk [vmem:[%s4 + $0x70] sm:$0xff] %vm2677, %v1150
  %2694 = vst.msk [vmem:[%s4 + $0x78] sm:$0x3] %vm2679, %v1155
  %2695 = vst.msk [vmem:[%s4 + $0x80] sm:$0xff] %vm2677, %v1160
  %2696 = vst.msk [vmem:[%s4 + $0x88] sm:$0x3] %vm2679, %v1165
  %2697 = vst.msk [vmem:[%s4 + $0x90] sm:$0xff] %vm2677, %v1170
  %2698 = vst.msk [vmem:[%s4 + $0x98] sm:$0x3] %vm2679, %v1175
  %2699 = vst.msk [vmem:[%s4 + $0xa0] sm:$0xff] %vm2677, %v1180
  %2700 = vst.msk [vmem:[%s4 + $0xa8] sm:$0x3] %vm2679, %v1185
  %2701 = vst.msk [vmem:[%s4 + $0xb0] sm:$0xff] %vm2677, %v1190
  %2702 = vst.msk [vmem:[%s4 + $0xb8] sm:$0x3] %vm2679, %v1195
  %2703 = vst.msk [vmem:[%s4 + $0xc0] sm:$0xff] %vm2677, %v1200
  %2704 = vst.msk [vmem:[%s4 + $0xc8] sm:$0x3] %vm2679, %v1205
  %2705 = vst.msk [vmem:[%s4 + $0xd0] sm:$0xff] %vm2677, %v1210
  %2706 = vst.msk [vmem:[%s4 + $0xd8] sm:$0x3] %vm2679, %v1215
  %2707 = vst.msk [vmem:[%s4 + $0xe0] sm:$0xff] %vm2677, %v1220
  %2708 = vst.msk [vmem:[%s4 + $0xe8] sm:$0x3] %vm2679, %v1225
  %2709 = vst.msk [vmem:[%s4 + $0xf0] sm:$0xff] %vm2677, %v1230
  %2710 = vst.msk [vmem:[%s4 + $0xf8] sm:$0x3] %vm2679, %v1235
  %2711 = vst.msk [vmem:[%s4 + $0x100] sm:$0xff] %vm2677, %v1240
  %2712 = vst.msk [vmem:[%s4 + $0x108] sm:$0x3] %vm2679, %v1245
  %2713 = vst.msk [vmem:[%s4 + $0x110] sm:$0xff] %vm2677, %v1250
  %2714 = vst.msk [vmem:[%s4 + $0x118] sm:$0x3] %vm2679, %v1255
  %2715 = vst.msk [vmem:[%s4 + $0x120] sm:$0xff] %vm2677, %v1260
  %2716 = vst.msk [vmem:[%s4 + $0x128] sm:$0x3] %vm2679, %v1265
  %2717 = vst.msk [vmem:[%s4 + $0x130] sm:$0xff] %vm2677, %v1270
  %2718 = vst.msk [vmem:[%s4 + $0x138] sm:$0x3] %vm2679, %v1275
  %2719 = vst.msk [vmem:[%s4 + $0x140] sm:$0xff] %vm2677, %v1280
  %2720 = vst.msk [vmem:[%s4 + $0x148] sm:$0x3] %vm2679, %v1285
  %2721 = vst.msk [vmem:[%s4 + $0x150] sm:$0xff] %vm2677, %v1290
  %2722 = vst.msk [vmem:[%s4 + $0x158] sm:$0x3] %vm2679, %v1295
  %2723 = vst.msk [vmem:[%s4 + $0x160] sm:$0xff] %vm2677, %v1300
  %2724 = vst.msk [vmem:[%s4 + $0x168] sm:$0x3] %vm2679, %v1305
  %2725 = vst.msk [vmem:[%s4 + $0x170] sm:$0xff] %vm2677, %v1310
  %2726 = vst.msk [vmem:[%s4 + $0x178] sm:$0x3] %vm2679, %v1315
  %2727 = vst.msk [vmem:[%s4 + $0x180] sm:$0xff] %vm2677, %v1320
  %2728 = vst.msk [vmem:[%s4 + $0x188] sm:$0x3] %vm2679, %v1325
  %2729 = vst.msk [vmem:[%s4 + $0x190] sm:$0xff] %vm2677, %v1330
  %2730 = vst.msk [vmem:[%s4 + $0x198] sm:$0x3] %vm2679, %v1335
  %2731 = vst.msk [vmem:[%s4 + $0x1a0] sm:$0xff] %vm2677, %v1340
  %2732 = vst.msk [vmem:[%s4 + $0x1a8] sm:$0x3] %vm2679, %v1345
  %2733 = vst.msk [vmem:[%s4 + $0x1b0] sm:$0xff] %vm2677, %v1350
  %2734 = vst.msk [vmem:[%s4 + $0x1b8] sm:$0x3] %vm2679, %v1355
  %2735 = vst.msk [vmem:[%s4 + $0x1c0] sm:$0xff] %vm2677, %v1360
  %2736 = vst.msk [vmem:[%s4 + $0x1c8] sm:$0x3] %vm2679, %v1365
  %2737 = vst.msk [vmem:[%s4 + $0x1d0] sm:$0xff] %vm2677, %v1370
  %2738 = vst.msk [vmem:[%s4 + $0x1d8] sm:$0x3] %vm2679, %v1375
  %2739 = vst.msk [vmem:[%s4 + $0x1e0] sm:$0xff] %vm2677, %v1380
  %2740 = vst.msk [vmem:[%s4 + $0x1e8] sm:$0x3] %vm2679, %v1385
  %2741 = vst.msk [vmem:[%s4 + $0x1f0] sm:$0xff] %vm2677, %v1390
  %2742 = vst.msk [vmem:[%s4 + $0x1f8] sm:$0x3] %vm2679, %v1395
  %2743 = vst.msk [vmem:[%s4 + $0x200] sm:$0xff] %vm2677, %v1400
  %2744 = vst.msk [vmem:[%s4 + $0x208] sm:$0x3] %vm2679, %v1405
  %2745 = vst.msk [vmem:[%s4 + $0x210] sm:$0xff] %vm2677, %v1410
  %2746 = vst.msk [vmem:[%s4 + $0x218] sm:$0x3] %vm2679, %v1415
  %2747 = vst.msk [vmem:[%s4 + $0x220] sm:$0xff] %vm2677, %v1420
  %2748 = vst.msk [vmem:[%s4 + $0x228] sm:$0x3] %vm2679, %v1425
  %2749 = vst.msk [vmem:[%s4 + $0x230] sm:$0xff] %vm2677, %v1430
  %2750 = vst.msk [vmem:[%s4 + $0x238] sm:$0x3] %vm2679, %v1435
  %2751 = vst.msk [vmem:[%s4 + $0x240] sm:$0xff] %vm2677, %v1440
  %2752 = vst.msk [vmem:[%s4 + $0x248] sm:$0x3] %vm2679, %v1445
  %2753 = vst.msk [vmem:[%s4 + $0x250] sm:$0xff] %vm2677, %v1450
  %2754 = vst.msk [vmem:[%s4 + $0x258] sm:$0x3] %vm2679, %v1455
  %2755 = vst.msk [vmem:[%s4 + $0x260] sm:$0xff] %vm2677, %v1460
  %2756 = vst.msk [vmem:[%s4 + $0x268] sm:$0x3] %vm2679, %v1465
  %2757 = vst.msk [vmem:[%s4 + $0x270] sm:$0xff] %vm2677, %v1470
  %2758 = vst.msk [vmem:[%s4 + $0x278] sm:$0x3] %vm2679, %v1475
  %2759 = vst.msk [vmem:[%s4 + $0x280] sm:$0xff] %vm2677, %v1480
  %2760 = vst.msk [vmem:[%s4 + $0x288] sm:$0x3] %vm2679, %v1485
  %2761 = vst.msk [vmem:[%s4 + $0x290] sm:$0xff] %vm2677, %v1490
  %2762 = vst.msk [vmem:[%s4 + $0x298] sm:$0x3] %vm2679, %v1495
  %2763 = vst.msk [vmem:[%s4 + $0x2a0] sm:$0xff] %vm2677, %v1500
  %2764 = vst.msk [vmem:[%s4 + $0x2a8] sm:$0x3] %vm2679, %v1505
  %2765 = vst.msk [vmem:[%s4 + $0x2b0] sm:$0xff] %vm2677, %v1510
  %2766 = vst.msk [vmem:[%s4 + $0x2b8] sm:$0x3] %vm2679, %v1515
  %2767 = vst.msk [vmem:[%s4 + $0x2c0] sm:$0xff] %vm2677, %v1520
  %2768 = vst.msk [vmem:[%s4 + $0x2c8] sm:$0x3] %vm2679, %v1525
  %2769 = vst.msk [vmem:[%s4 + $0x2d0] sm:$0xff] %vm2677, %v1530
  %2770 = vst.msk [vmem:[%s4 + $0x2d8] sm:$0x3] %vm2679, %v1535
  %2771 = vst.msk [vmem:[%s4 + $0x2e0] sm:$0xff] %vm2677, %v1540
  %2772 = vst.msk [vmem:[%s4 + $0x2e8] sm:$0x3] %vm2679, %v1545
  %2773 = vst.msk [vmem:[%s4 + $0x2f0] sm:$0xff] %vm2677, %v1550
  %2774 = vst.msk [vmem:[%s4 + $0x2f8] sm:$0x3] %vm2679, %v1555
  %2775 = vst.msk [vmem:[%s4 + $0x300] sm:$0xff] %vm2677, %v1560
  %2776 = vst.msk [vmem:[%s4 + $0x308] sm:$0x3] %vm2679, %v1565
  %2777 = vst.msk [vmem:[%s4 + $0x310] sm:$0xff] %vm2677, %v1570
  %2778 = vst.msk [vmem:[%s4 + $0x318] sm:$0x3] %vm2679, %v1575
  %2779 = vst.msk [vmem:[%s4 + $0x320] sm:$0xff] %vm2677, %v1580
  %2780 = vst.msk [vmem:[%s4 + $0x328] sm:$0x3] %vm2679, %v1585
  %2781 = vst.msk [vmem:[%s4 + $0x330] sm:$0xff] %vm2677, %v1590
  %2782 = vst.msk [vmem:[%s4 + $0x338] sm:$0x3] %vm2679, %v1595
  %2783 = vst.msk [vmem:[%s4 + $0x340] sm:$0xff] %vm2677, %v1600
  %2784 = vst.msk [vmem:[%s4 + $0x348] sm:$0x3] %vm2679, %v1605
  %2785 = vst.msk [vmem:[%s4 + $0x350] sm:$0xff] %vm2677, %v1610
  %2786 = vst.msk [vmem:[%s4 + $0x358] sm:$0x3] %vm2679, %v1615
  %2787 = vst.msk [vmem:[%s4 + $0x360] sm:$0xff] %vm2677, %v1620
  %2788 = vst.msk [vmem:[%s4 + $0x368] sm:$0x3] %vm2679, %v1625
  %2789 = vst.msk [vmem:[%s4 + $0x370] sm:$0xff] %vm2677, %v1630
  %2790 = vst.msk [vmem:[%s4 + $0x378] sm:$0x3] %vm2679, %v1635
  %2791 = vst.msk [vmem:[%s4 + $0x380] sm:$0xff] %vm2677, %v1640
  %2792 = vst.msk [vmem:[%s4 + $0x388] sm:$0x3] %vm2679, %v1645
  %2793 = vst.msk [vmem:[%s4 + $0x390] sm:$0xff] %vm2677, %v1650
  %2794 = vst.msk [vmem:[%s4 + $0x398] sm:$0x3] %vm2679, %v1655
  %2795 = vst.msk [vmem:[%s4 + $0x3a0] sm:$0xff] %vm2677, %v1660
  %2796 = vst.msk [vmem:[%s4 + $0x3a8] sm:$0x3] %vm2679, %v1665
  %2797 = vst.msk [vmem:[%s4 + $0x3b0] sm:$0xff] %vm2677, %v1670
  %2798 = vst.msk [vmem:[%s4 + $0x3b8] sm:$0x3] %vm2679, %v1675
  %2799 = vst.msk [vmem:[%s4 + $0x3c0] sm:$0xff] %vm2677, %v1680
  %2800 = vst.msk [vmem:[%s4 + $0x3c8] sm:$0x3] %vm2679, %v1685
  %2801 = vst.msk [vmem:[%s4 + $0x3d0] sm:$0xff] %vm2677, %v1690
  %2802 = vst.msk [vmem:[%s4 + $0x3d8] sm:$0x3] %vm2679, %v1695
  %2803 = vst.msk [vmem:[%s4 + $0x3e0] sm:$0xff] %vm2677, %v1700
  %2804 = vst.msk [vmem:[%s4 + $0x3e8] sm:$0x3] %vm2679, %v1705
  %2805 = vst.msk [vmem:[%s4 + $0x3f0] sm:$0xff] %vm2677, %v1710
  %2806 = vst.msk [vmem:[%s4 + $0x3f8] sm:$0x3] %vm2679, %v1715
  %2807 = vst.msk [vmem:[%s4 + $0x400] sm:$0xff] %vm2677, %v1720
  %2808 = vst.msk [vmem:[%s4 + $0x408] sm:$0x3] %vm2679, %v1725
  %2809 = vst.msk [vmem:[%s4 + $0x410] sm:$0xff] %vm2677, %v1730
  %2810 = vst.msk [vmem:[%s4 + $0x418] sm:$0x3] %vm2679, %v1735
  %2811 = vst.msk [vmem:[%s4 + $0x420] sm:$0xff] %vm2677, %v1740
  %2812 = vst.msk [vmem:[%s4 + $0x428] sm:$0x3] %vm2679, %v1745
  %2813 = vst.msk [vmem:[%s4 + $0x430] sm:$0xff] %vm2677, %v1750
  %2814 = vst.msk [vmem:[%s4 + $0x438] sm:$0x3] %vm2679, %v1755
  %2815 = vst.msk [vmem:[%s4 + $0x440] sm:$0xff] %vm2677, %v1760
  %2816 = vst.msk [vmem:[%s4 + $0x448] sm:$0x3] %vm2679, %v1765
  %2817 = vst.msk [vmem:[%s4 + $0x450] sm:$0xff] %vm2677, %v1770
  %2818 = vst.msk [vmem:[%s4 + $0x458] sm:$0x3] %vm2679, %v1775
  %2819 = vst.msk [vmem:[%s4 + $0x460] sm:$0xff] %vm2677, %v1780
  %2820 = vst.msk [vmem:[%s4 + $0x468] sm:$0x3] %vm2679, %v1785
  %2821 = vst.msk [vmem:[%s4 + $0x470] sm:$0xff] %vm2677, %v1790
  %2822 = vst.msk [vmem:[%s4 + $0x478] sm:$0x3] %vm2679, %v1795
  %2823 = vst.msk [vmem:[%s4 + $0x480] sm:$0xff] %vm2677, %v1800
  %2824 = vst.msk [vmem:[%s4 + $0x488] sm:$0x3] %vm2679, %v1805
  %2825 = vst.msk [vmem:[%s4 + $0x490] sm:$0xff] %vm2677, %v1810
  %2826 = vst.msk [vmem:[%s4 + $0x498] sm:$0x3] %vm2679, %v1815
  %2827 = vst.msk [vmem:[%s4 + $0x4a0] sm:$0xff] %vm2677, %v1820
  %2828 = vst.msk [vmem:[%s4 + $0x4a8] sm:$0x3] %vm2679, %v1825
  %2829 = vst.msk [vmem:[%s4 + $0x4b0] sm:$0xff] %vm2677, %v1830
  %2830 = vst.msk [vmem:[%s4 + $0x4b8] sm:$0x3] %vm2679, %v1835
  %2831 = vst.msk [vmem:[%s4 + $0x4c0] sm:$0xff] %vm2677, %v1840
  %2832 = vst.msk [vmem:[%s4 + $0x4c8] sm:$0x3] %vm2679, %v1845
  %2833 = vst.msk [vmem:[%s4 + $0x4d0] sm:$0xff] %vm2677, %v1850
  %2834 = vst.msk [vmem:[%s4 + $0x4d8] sm:$0x3] %vm2679, %v1855
  %2835 = vst.msk [vmem:[%s4 + $0x4e0] sm:$0xff] %vm2677, %v1860
  %2836 = vst.msk [vmem:[%s4 + $0x4e8] sm:$0x3] %vm2679, %v1865
  %2837 = vst.msk [vmem:[%s4 + $0x4f0] sm:$0xff] %vm2677, %v1870
  %2838 = vst.msk [vmem:[%s4 + $0x4f8] sm:$0x3] %vm2679, %v1875
  %2839 = vst.msk [vmem:[%s4 + $0x500] sm:$0xff] %vm2677, %v1880
  %2840 = vst.msk [vmem:[%s4 + $0x508] sm:$0x3] %vm2679, %v1885
  %2841 = vst.msk [vmem:[%s4 + $0x510] sm:$0xff] %vm2677, %v1890
  %2842 = vst.msk [vmem:[%s4 + $0x518] sm:$0x3] %vm2679, %v1895
  %2843 = vst.msk [vmem:[%s4 + $0x520] sm:$0xff] %vm2677, %v1900
  %2844 = vst.msk [vmem:[%s4 + $0x528] sm:$0x3] %vm2679, %v1905
  %2845 = vst.msk [vmem:[%s4 + $0x530] sm:$0xff] %vm2677, %v1910
  %2846 = vst.msk [vmem:[%s4 + $0x538] sm:$0x3] %vm2679, %v1915
  %2847 = vst.msk [vmem:[%s4 + $0x540] sm:$0xff] %vm2677, %v1920
  %2848 = vst.msk [vmem:[%s4 + $0x548] sm:$0x3] %vm2679, %v1925
  %2849 = vst.msk [vmem:[%s4 + $0x550] sm:$0xff] %vm2677, %v1930
  %2850 = vst.msk [vmem:[%s4 + $0x558] sm:$0x3] %vm2679, %v1935
  %2851 = vst.msk [vmem:[%s4 + $0x560] sm:$0xff] %vm2677, %v1940
  %2852 = vst.msk [vmem:[%s4 + $0x568] sm:$0x3] %vm2679, %v1945
  %2853 = vst.msk [vmem:[%s4 + $0x570] sm:$0xff] %vm2677, %v1950
  %2854 = vst.msk [vmem:[%s4 + $0x578] sm:$0x3] %vm2679, %v1955
  %2855 = vst.msk [vmem:[%s4 + $0x580] sm:$0xff] %vm2677, %v1960
  %2856 = vst.msk [vmem:[%s4 + $0x588] sm:$0x3] %vm2679, %v1965
  %2857 = vst.msk [vmem:[%s4 + $0x590] sm:$0xff] %vm2677, %v1970
  %2858 = vst.msk [vmem:[%s4 + $0x598] sm:$0x3] %vm2679, %v1975
  %2859 = vst.msk [vmem:[%s4 + $0x5a0] sm:$0xff] %vm2677, %v1980
  %2860 = vst.msk [vmem:[%s4 + $0x5a8] sm:$0x3] %vm2679, %v1985
  %2861 = vst.msk [vmem:[%s4 + $0x5b0] sm:$0xff] %vm2677, %v1990
  %2862 = vst.msk [vmem:[%s4 + $0x5b8] sm:$0x3] %vm2679, %v1995
  %2863 = vst.msk [vmem:[%s4 + $0x5c0] sm:$0xff] %vm2677, %v2000
  %2864 = vst.msk [vmem:[%s4 + $0x5c8] sm:$0x3] %vm2679, %v2005
  %2865 = vst.msk [vmem:[%s4 + $0x5d0] sm:$0xff] %vm2677, %v2010
  %2866 = vst.msk [vmem:[%s4 + $0x5d8] sm:$0x3] %vm2679, %v2015
  %2867 = vst.msk [vmem:[%s4 + $0x5e0] sm:$0xff] %vm2677, %v2020
  %2868 = vst.msk [vmem:[%s4 + $0x5e8] sm:$0x3] %vm2679, %v2025
  %2869 = vst.msk [vmem:[%s4 + $0x5f0] sm:$0xff] %vm2677, %v2030
  %2870 = vst.msk [vmem:[%s4 + $0x5f8] sm:$0x3] %vm2679, %v2035
  %2871 = vst.msk [vmem:[%s4 + $0x600] sm:$0xff] %vm2677, %v2040
  %2872 = vst.msk [vmem:[%s4 + $0x608] sm:$0x3] %vm2679, %v2045
  %2873 = vst.msk [vmem:[%s4 + $0x610] sm:$0xff] %vm2677, %v2050
  %2874 = vst.msk [vmem:[%s4 + $0x618] sm:$0x3] %vm2679, %v2055
  %2875 = vst.msk [vmem:[%s4 + $0x620] sm:$0xff] %vm2677, %v2060
  %2876 = vst.msk [vmem:[%s4 + $0x628] sm:$0x3] %vm2679, %v2065
  %2877 = vst.msk [vmem:[%s4 + $0x630] sm:$0xff] %vm2677, %v2070
  %2878 = vst.msk [vmem:[%s4 + $0x638] sm:$0x3] %vm2679, %v2075
  %2879 = vst.msk [vmem:[%s4 + $0x640] sm:$0xff] %vm2677, %v2080
  %2880 = vst.msk [vmem:[%s4 + $0x648] sm:$0x3] %vm2679, %v2085
  %2881 = vst.msk [vmem:[%s4 + $0x650] sm:$0xff] %vm2677, %v2090
  %2882 = vst.msk [vmem:[%s4 + $0x658] sm:$0x3] %vm2679, %v2095
  %2883 = vst.msk [vmem:[%s4 + $0x660] sm:$0xff] %vm2677, %v2100
  %2884 = vst.msk [vmem:[%s4 + $0x668] sm:$0x3] %vm2679, %v2105
  %2885 = vst.msk [vmem:[%s4 + $0x670] sm:$0xff] %vm2677, %v2110
  %2886 = vst.msk [vmem:[%s4 + $0x678] sm:$0x3] %vm2679, %v2115
  %2887 = vst.msk [vmem:[%s4 + $0x680] sm:$0xff] %vm2677, %v2120
  %2888 = vst.msk [vmem:[%s4 + $0x688] sm:$0x3] %vm2679, %v2125
  %2889 = vst.msk [vmem:[%s4 + $0x690] sm:$0xff] %vm2677, %v2130
  %2890 = vst.msk [vmem:[%s4 + $0x698] sm:$0x3] %vm2679, %v2135
  %2891 = vst.msk [vmem:[%s4 + $0x6a0] sm:$0xff] %vm2677, %v2140
  %2892 = vst.msk [vmem:[%s4 + $0x6a8] sm:$0x3] %vm2679, %v2145
  %2893 = vst.msk [vmem:[%s4 + $0x6b0] sm:$0xff] %vm2677, %v2150
  %2894 = vst.msk [vmem:[%s4 + $0x6b8] sm:$0x3] %vm2679, %v2155
  %2895 = vst.msk [vmem:[%s4 + $0x6c0] sm:$0xff] %vm2677, %v2160
  %2896 = vst.msk [vmem:[%s4 + $0x6c8] sm:$0x3] %vm2679, %v2165
  %2897 = vst.msk [vmem:[%s4 + $0x6d0] sm:$0xff] %vm2677, %v2170
  %2898 = vst.msk [vmem:[%s4 + $0x6d8] sm:$0x3] %vm2679, %v2175
  %2899 = vst.msk [vmem:[%s4 + $0x6e0] sm:$0xff] %vm2677, %v2180
  %2900 = vst.msk [vmem:[%s4 + $0x6e8] sm:$0x3] %vm2679, %v2185
  %2901 = vst.msk [vmem:[%s4 + $0x6f0] sm:$0xff] %vm2677, %v2190
  %2902 = vst.msk [vmem:[%s4 + $0x6f8] sm:$0x3] %vm2679, %v2195
  %2903 = vst.msk [vmem:[%s4 + $0x700] sm:$0xff] %vm2677, %v2200
  %2904 = vst.msk [vmem:[%s4 + $0x708] sm:$0x3] %vm2679, %v2205
  %2905 = vst.msk [vmem:[%s4 + $0x710] sm:$0xff] %vm2677, %v2210
  %2906 = vst.msk [vmem:[%s4 + $0x718] sm:$0x3] %vm2679, %v2215
  %2907 = vst.msk [vmem:[%s4 + $0x720] sm:$0xff] %vm2677, %v2220
  %2908 = vst.msk [vmem:[%s4 + $0x728] sm:$0x3] %vm2679, %v2225
  %2909 = vst.msk [vmem:[%s4 + $0x730] sm:$0xff] %vm2677, %v2230
  %2910 = vst.msk [vmem:[%s4 + $0x738] sm:$0x3] %vm2679, %v2235
  %2911 = vst.msk [vmem:[%s4 + $0x740] sm:$0xff] %vm2677, %v2240
  %2912 = vst.msk [vmem:[%s4 + $0x748] sm:$0x3] %vm2679, %v2245
  %2913 = vst.msk [vmem:[%s4 + $0x750] sm:$0xff] %vm2677, %v2250
  %2914 = vst.msk [vmem:[%s4 + $0x758] sm:$0x3] %vm2679, %v2255
  %2915 = vst.msk [vmem:[%s4 + $0x760] sm:$0xff] %vm2677, %v2260
  %2916 = vst.msk [vmem:[%s4 + $0x768] sm:$0x3] %vm2679, %v2265
  %2917 = vst.msk [vmem:[%s4 + $0x770] sm:$0xff] %vm2677, %v2270
  %2918 = vst.msk [vmem:[%s4 + $0x778] sm:$0x3] %vm2679, %v2275
  %2919 = vst.msk [vmem:[%s4 + $0x780] sm:$0xff] %vm2677, %v2280
  %2920 = vst.msk [vmem:[%s4 + $0x788] sm:$0x3] %vm2679, %v2285
  %2921 = vst.msk [vmem:[%s4 + $0x790] sm:$0xff] %vm2677, %v2290
  %2922 = vst.msk [vmem:[%s4 + $0x798] sm:$0x3] %vm2679, %v2295
  %2923 = vst.msk [vmem:[%s4 + $0x7a0] sm:$0xff] %vm2677, %v2300
  %2924 = vst.msk [vmem:[%s4 + $0x7a8] sm:$0x3] %vm2679, %v2305
  %2925 = vst.msk [vmem:[%s4 + $0x7b0] sm:$0xff] %vm2677, %v2310
  %2926 = vst.msk [vmem:[%s4 + $0x7b8] sm:$0x3] %vm2679, %v2315
  %2927 = vst.msk [vmem:[%s4 + $0x7c0] sm:$0xff] %vm2677, %v2320
  %2928 = vst.msk [vmem:[%s4 + $0x7c8] sm:$0x3] %vm2679, %v2325
  %2929 = vst.msk [vmem:[%s4 + $0x7d0] sm:$0xff] %vm2677, %v2330
  %2930 = vst.msk [vmem:[%s4 + $0x7d8] sm:$0x3] %vm2679, %v2335
  %2931 = vst.msk [vmem:[%s4 + $0x7e0] sm:$0xff] %vm2677, %v2340
  %2932 = vst.msk [vmem:[%s4 + $0x7e8] sm:$0x3] %vm2679, %v2345
  %2933 = vst.msk [vmem:[%s4 + $0x7f0] sm:$0xff] %vm2677, %v2350
  %2934 = vst.msk [vmem:[%s4 + $0x7f8] sm:$0x3] %vm2679, %v2355
  %2935 = vst.msk [vmem:[%s4 + $0x800] sm:$0xff] %vm2677, %v2360
  %2936 = vst.msk [vmem:[%s4 + $0x808] sm:$0x3] %vm2679, %v2365
  %2937 = vst.msk [vmem:[%s4 + $0x810] sm:$0xff] %vm2677, %v2370
  %2938 = vst.msk [vmem:[%s4 + $0x818] sm:$0x3] %vm2679, %v2375
  %2939 = vst.msk [vmem:[%s4 + $0x820] sm:$0xff] %vm2677, %v2380
  %2940 = vst.msk [vmem:[%s4 + $0x828] sm:$0x3] %vm2679, %v2385
  %2941 = vst.msk [vmem:[%s4 + $0x830] sm:$0xff] %vm2677, %v2390
  %2942 = vst.msk [vmem:[%s4 + $0x838] sm:$0x3] %vm2679, %v2395
  %2943 = vst.msk [vmem:[%s4 + $0x840] sm:$0xff] %vm2677, %v2400
  %2944 = vst.msk [vmem:[%s4 + $0x848] sm:$0x3] %vm2679, %v2405
  %2945 = vst.msk [vmem:[%s4 + $0x850] sm:$0xff] %vm2677, %v2410
  %2946 = vst.msk [vmem:[%s4 + $0x858] sm:$0x3] %vm2679, %v2415
  %2947 = vst.msk [vmem:[%s4 + $0x860] sm:$0xff] %vm2677, %v2420
  %2948 = vst.msk [vmem:[%s4 + $0x868] sm:$0x3] %vm2679, %v2425
  %2949 = vst.msk [vmem:[%s4 + $0x870] sm:$0xff] %vm2677, %v2430
  %2950 = vst.msk [vmem:[%s4 + $0x878] sm:$0x3] %vm2679, %v2435
  %2951 = vst.msk [vmem:[%s4 + $0x880] sm:$0xff] %vm2677, %v2440
  %2952 = vst.msk [vmem:[%s4 + $0x888] sm:$0x3] %vm2679, %v2445
  %2953 = vst.msk [vmem:[%s4 + $0x890] sm:$0xff] %vm2677, %v2450
  %2954 = vst.msk [vmem:[%s4 + $0x898] sm:$0x3] %vm2679, %v2455
  %2955 = vst.msk [vmem:[%s4 + $0x8a0] sm:$0xff] %vm2677, %v2460
  %2956 = vst.msk [vmem:[%s4 + $0x8a8] sm:$0x3] %vm2679, %v2465
  %2957 = vst.msk [vmem:[%s4 + $0x8b0] sm:$0xff] %vm2677, %v2470
  %2958 = vst.msk [vmem:[%s4 + $0x8b8] sm:$0x3] %vm2679, %v2475
  %2959 = vst.msk [vmem:[%s4 + $0x8c0] sm:$0xff] %vm2677, %v2480
  %2960 = vst.msk [vmem:[%s4 + $0x8c8] sm:$0x3] %vm2679, %v2485
  %2961 = vst.msk [vmem:[%s4 + $0x8d0] sm:$0xff] %vm2677, %v2490
  %2962 = vst.msk [vmem:[%s4 + $0x8d8] sm:$0x3] %vm2679, %v2495
  %2963 = vst.msk [vmem:[%s4 + $0x8e0] sm:$0xff] %vm2677, %v2500
  %2964 = vst.msk [vmem:[%s4 + $0x8e8] sm:$0x3] %vm2679, %v2505
  %2965 = vst.msk [vmem:[%s4 + $0x8f0] sm:$0xff] %vm2677, %v2510
  %2966 = vst.msk [vmem:[%s4 + $0x8f8] sm:$0x3] %vm2679, %v2515
  %2967 = vst.msk [vmem:[%s4 + $0x900] sm:$0xff] %vm2677, %v2520
  %2968 = vst.msk [vmem:[%s4 + $0x908] sm:$0x3] %vm2679, %v2525
  %2969 = vst.msk [vmem:[%s4 + $0x910] sm:$0xff] %vm2677, %v2530
  %2970 = vst.msk [vmem:[%s4 + $0x918] sm:$0x3] %vm2679, %v2535
  %2971 = vst.msk [vmem:[%s4 + $0x920] sm:$0xff] %vm2677, %v2540
  %2972 = vst.msk [vmem:[%s4 + $0x928] sm:$0x3] %vm2679, %v2545
  %2973 = vst.msk [vmem:[%s4 + $0x930] sm:$0xff] %vm2677, %v2550
  %2974 = vst.msk [vmem:[%s4 + $0x938] sm:$0x3] %vm2679, %v2555
  %2975 = vst.msk [vmem:[%s4 + $0x940] sm:$0xff] %vm2677, %v2560
  %2976 = vst.msk [vmem:[%s4 + $0x948] sm:$0x3] %vm2679, %v2565
  %2977 = vst.msk [vmem:[%s4 + $0x950] sm:$0xff] %vm2677, %v2570
  %2978 = vst.msk [vmem:[%s4 + $0x958] sm:$0x3] %vm2679, %v2575
  %2979 = vst.msk [vmem:[%s4 + $0x960] sm:$0xff] %vm2677, %v2580
  %2980 = vst.msk [vmem:[%s4 + $0x968] sm:$0x3] %vm2679, %v2585
  %2981 = vst.msk [vmem:[%s4 + $0x970] sm:$0xff] %vm2677, %v2590
  %2982 = vst.msk [vmem:[%s4 + $0x978] sm:$0x3] %vm2679, %v2595
  %2983 = vst.msk [vmem:[%s4 + $0x980] sm:$0xff] %vm2677, %v2600
  %2984 = vst.msk [vmem:[%s4 + $0x988] sm:$0x3] %vm2679, %v2605
  %2985 = vst.msk [vmem:[%s4 + $0x990] sm:$0xff] %vm2677, %v2610
  %2986 = vst.msk [vmem:[%s4 + $0x998] sm:$0x3] %vm2679, %v2615
  %2987 = vst.msk [vmem:[%s4 + $0x9a0] sm:$0xff] %vm2677, %v2620
  %2988 = vst.msk [vmem:[%s4 + $0x9a8] sm:$0x3] %vm2679, %v2625
  %2989 = vst.msk [vmem:[%s4 + $0x9b0] sm:$0xff] %vm2677, %v2630
  %2990 = vst.msk [vmem:[%s4 + $0x9b8] sm:$0x3] %vm2679, %v2635
  %2991 = vst.msk [vmem:[%s4 + $0x9c0] sm:$0xff] %vm2677, %v2640
  %2992 = vst.msk [vmem:[%s4 + $0x9c8] sm:$0x3] %vm2679, %v2645
  %2993 = vst.msk [vmem:[%s4 + $0x9d0] sm:$0xff] %vm2677, %v2650
  %2994 = vst.msk [vmem:[%s4 + $0x9d8] sm:$0x3] %vm2679, %v2655
  %2995 = vst.msk [vmem:[%s4 + $0x9e0] sm:$0xff] %vm2677, %v2660
  %2996 = vst.msk [vmem:[%s4 + $0x9e8] sm:$0x3] %vm2679, %v2665
  %2997 = vst.msk [vmem:[%s4 + $0x9f0] sm:$0xff] %vm2677, %v2670
  %2998 = vst.msk [vmem:[%s4 + $0x9f8] sm:$0x3] %vm2679, %v2675
  %3127 = vrot.lane.b32.xlu0 %v593, 1
  %v3128 = vpop.permute.xlu0 %3127
  %3129 = vrot.lane.b32.xlu0 %v594, 1
  %v3130 = vpop.permute.xlu0 %3129
  %3131 = vrot.lane.b32.xlu0 %v595, 1
  %v3132 = vpop.permute.xlu0 %3131
  %3133 = vrot.lane.b32.xlu0 %v596, 1
  %v3134 = vpop.permute.xlu0 %3133
  %3135 = vrot.lane.b32.xlu0 %v597, 1
  %v3136 = vpop.permute.xlu0 %3135
  %3137 = vrot.lane.b32.xlu0 %v598, 1
  %v3138 = vpop.permute.xlu0 %3137
  %3139 = vrot.lane.b32.xlu0 %v599, 1
  %v3140 = vpop.permute.xlu0 %3139
  %3141 = vrot.lane.b32.xlu0 %v600, 1
  %v3142 = vpop.permute.xlu0 %3141
  %3143 = vrot.lane.b32.xlu0 %v601, 1
  %v3144 = vpop.permute.xlu0 %3143
  %3145 = vrot.lane.b32.xlu0 %v602, 1
  %v3146 = vpop.permute.xlu0 %3145
  %3147 = vrot.lane.b32.xlu0 %v603, 1
  %v3148 = vpop.permute.xlu0 %3147
  %3149 = vrot.lane.b32.xlu0 %v604, 1
  %v3150 = vpop.permute.xlu0 %3149
  %3151 = vrot.lane.b32.xlu0 %v605, 1
  %v3152 = vpop.permute.xlu0 %3151
  %3153 = vrot.lane.b32.xlu0 %v606, 1
  %v3154 = vpop.permute.xlu0 %3153
  %3155 = vrot.lane.b32.xlu0 %v607, 1
  %v3156 = vpop.permute.xlu0 %3155
  %3157 = vrot.lane.b32.xlu0 %v608, 1
  %v3158 = vpop.permute.xlu0 %3157
  %3159 = vrot.lane.b32.xlu0 %v609, 1
  %v3160 = vpop.permute.xlu0 %3159
  %3161 = vrot.lane.b32.xlu0 %v610, 1
  %v3162 = vpop.permute.xlu0 %3161
  %3163 = vrot.lane.b32.xlu0 %v611, 1
  %v3164 = vpop.permute.xlu0 %3163
  %3165 = vrot.lane.b32.xlu0 %v612, 1
  %v3166 = vpop.permute.xlu0 %3165
  %3167 = vrot.lane.b32.xlu0 %v613, 1
  %v3168 = vpop.permute.xlu0 %3167
  %3169 = vrot.lane.b32.xlu0 %v614, 1
  %v3170 = vpop.permute.xlu0 %3169
  %3171 = vrot.lane.b32.xlu0 %v615, 1
  %v3172 = vpop.permute.xlu0 %3171
  %3173 = vrot.lane.b32.xlu0 %v616, 1
  %v3174 = vpop.permute.xlu0 %3173
  %3175 = vrot.lane.b32.xlu0 %v617, 1
  %v3176 = vpop.permute.xlu0 %3175
  %3177 = vrot.lane.b32.xlu0 %v618, 1
  %v3178 = vpop.permute.xlu0 %3177
  %3179 = vrot.lane.b32.xlu0 %v619, 1
  %v3180 = vpop.permute.xlu0 %3179
  %3181 = vrot.lane.b32.xlu0 %v620, 1
  %v3182 = vpop.permute.xlu0 %3181
  %3183 = vrot.lane.b32.xlu0 %v621, 1
  %v3184 = vpop.permute.xlu0 %3183
  %3185 = vrot.lane.b32.xlu0 %v622, 1
  %v3186 = vpop.permute.xlu0 %3185
  %3187 = vrot.lane.b32.xlu0 %v623, 1
  %v3188 = vpop.permute.xlu0 %3187
  %3189 = vrot.lane.b32.xlu0 %v624, 1
  %v3190 = vpop.permute.xlu0 %3189
  %3191 = vrot.lane.b32.xlu0 %v625, 1
  %v3192 = vpop.permute.xlu0 %3191
  %3193 = vrot.lane.b32.xlu0 %v626, 1
  %v3194 = vpop.permute.xlu0 %3193
  %3195 = vrot.lane.b32.xlu0 %v627, 1
  %v3196 = vpop.permute.xlu0 %3195
  %3197 = vrot.lane.b32.xlu0 %v628, 1
  %v3198 = vpop.permute.xlu0 %3197
  %3199 = vrot.lane.b32.xlu0 %v629, 1
  %v3200 = vpop.permute.xlu0 %3199
  %3201 = vrot.lane.b32.xlu0 %v630, 1
  %v3202 = vpop.permute.xlu0 %3201
  %3203 = vrot.lane.b32.xlu0 %v631, 1
  %v3204 = vpop.permute.xlu0 %3203
  %3205 = vrot.lane.b32.xlu0 %v632, 1
  %v3206 = vpop.permute.xlu0 %3205
  %3207 = vrot.lane.b32.xlu0 %v633, 1
  %v3208 = vpop.permute.xlu0 %3207
  %3209 = vrot.lane.b32.xlu0 %v634, 1
  %v3210 = vpop.permute.xlu0 %3209
  %3211 = vrot.lane.b32.xlu0 %v635, 1
  %v3212 = vpop.permute.xlu0 %3211
  %3213 = vrot.lane.b32.xlu0 %v636, 1
  %v3214 = vpop.permute.xlu0 %3213
  %3215 = vrot.lane.b32.xlu0 %v637, 1
  %v3216 = vpop.permute.xlu0 %3215
  %3217 = vrot.lane.b32.xlu0 %v638, 1
  %v3218 = vpop.permute.xlu0 %3217
  %3219 = vrot.lane.b32.xlu0 %v639, 1
  %v3220 = vpop.permute.xlu0 %3219
  %3221 = vrot.lane.b32.xlu0 %v640, 1
  %v3222 = vpop.permute.xlu0 %3221
  %3223 = vrot.lane.b32.xlu0 %v641, 1
  %v3224 = vpop.permute.xlu0 %3223
  %3225 = vrot.lane.b32.xlu0 %v642, 1
  %v3226 = vpop.permute.xlu0 %3225
  %3227 = vrot.lane.b32.xlu0 %v643, 1
  %v3228 = vpop.permute.xlu0 %3227
  %3229 = vrot.lane.b32.xlu0 %v644, 1
  %v3230 = vpop.permute.xlu0 %3229
  %3231 = vrot.lane.b32.xlu0 %v645, 1
  %v3232 = vpop.permute.xlu0 %3231
  %3233 = vrot.lane.b32.xlu0 %v646, 1
  %v3234 = vpop.permute.xlu0 %3233
  %3235 = vrot.lane.b32.xlu0 %v647, 1
  %v3236 = vpop.permute.xlu0 %3235
  %3237 = vrot.lane.b32.xlu0 %v648, 1
  %v3238 = vpop.permute.xlu0 %3237
  %3239 = vrot.lane.b32.xlu0 %v649, 1
  %v3240 = vpop.permute.xlu0 %3239
  %3241 = vrot.lane.b32.xlu0 %v650, 1
  %v3242 = vpop.permute.xlu0 %3241
  %3243 = vrot.lane.b32.xlu0 %v651, 1
  %v3244 = vpop.permute.xlu0 %3243
  %3245 = vrot.lane.b32.xlu0 %v652, 1
  %v3246 = vpop.permute.xlu0 %3245
  %3247 = vrot.lane.b32.xlu0 %v653, 1
  %v3248 = vpop.permute.xlu0 %3247
  %3249 = vrot.lane.b32.xlu0 %v654, 1
  %v3250 = vpop.permute.xlu0 %3249
  %3251 = vrot.lane.b32.xlu0 %v655, 1
  %v3252 = vpop.permute.xlu0 %3251
  %3253 = vrot.lane.b32.xlu0 %v656, 1
  %v3254 = vpop.permute.xlu0 %3253
  %3255 = vrot.lane.b32.xlu0 %v657, 1
  %v3256 = vpop.permute.xlu0 %3255
  %3257 = vrot.lane.b32.xlu0 %v658, 1
  %v3258 = vpop.permute.xlu0 %3257
  %3259 = vrot.lane.b32.xlu0 %v659, 1
  %v3260 = vpop.permute.xlu0 %3259
  %3261 = vrot.lane.b32.xlu0 %v660, 1
  %v3262 = vpop.permute.xlu0 %3261
  %3263 = vrot.lane.b32.xlu0 %v661, 1
  %v3264 = vpop.permute.xlu0 %3263
  %3265 = vrot.lane.b32.xlu0 %v662, 1
  %v3266 = vpop.permute.xlu0 %3265
  %3267 = vrot.lane.b32.xlu0 %v663, 1
  %v3268 = vpop.permute.xlu0 %3267
  %3269 = vrot.lane.b32.xlu0 %v664, 1
  %v3270 = vpop.permute.xlu0 %3269
  %3271 = vrot.lane.b32.xlu0 %v665, 1
  %v3272 = vpop.permute.xlu0 %3271
  %3273 = vrot.lane.b32.xlu0 %v666, 1
  %v3274 = vpop.permute.xlu0 %3273
  %3275 = vrot.lane.b32.xlu0 %v667, 1
  %v3276 = vpop.permute.xlu0 %3275
  %3277 = vrot.lane.b32.xlu0 %v668, 1
  %v3278 = vpop.permute.xlu0 %3277
  %3279 = vrot.lane.b32.xlu0 %v669, 1
  %v3280 = vpop.permute.xlu0 %3279
  %3281 = vrot.lane.b32.xlu0 %v670, 1
  %v3282 = vpop.permute.xlu0 %3281
  %3283 = vrot.lane.b32.xlu0 %v671, 1
  %v3284 = vpop.permute.xlu0 %3283
  %3285 = vrot.lane.b32.xlu0 %v672, 1
  %v3286 = vpop.permute.xlu0 %3285
  %3287 = vrot.lane.b32.xlu0 %v673, 1
  %v3288 = vpop.permute.xlu0 %3287
  %3289 = vrot.lane.b32.xlu0 %v674, 1
  %v3290 = vpop.permute.xlu0 %3289
  %3291 = vrot.lane.b32.xlu0 %v675, 1
  %v3292 = vpop.permute.xlu0 %3291
  %3293 = vrot.lane.b32.xlu0 %v676, 1
  %v3294 = vpop.permute.xlu0 %3293
  %3295 = vrot.lane.b32.xlu0 %v677, 1
  %v3296 = vpop.permute.xlu0 %3295
  %3297 = vrot.lane.b32.xlu0 %v678, 1
  %v3298 = vpop.permute.xlu0 %3297
  %3299 = vrot.lane.b32.xlu0 %v679, 1
  %v3300 = vpop.permute.xlu0 %3299
  %3301 = vrot.lane.b32.xlu0 %v680, 1
  %v3302 = vpop.permute.xlu0 %3301
  %3303 = vrot.lane.b32.xlu0 %v681, 1
  %v3304 = vpop.permute.xlu0 %3303
  %3305 = vrot.lane.b32.xlu0 %v682, 1
  %v3306 = vpop.permute.xlu0 %3305
  %3307 = vrot.lane.b32.xlu0 %v683, 1
  %v3308 = vpop.permute.xlu0 %3307
  %3309 = vrot.lane.b32.xlu0 %v684, 1
  %v3310 = vpop.permute.xlu0 %3309
  %3311 = vrot.lane.b32.xlu0 %v685, 1
  %v3312 = vpop.permute.xlu0 %3311
  %3313 = vrot.lane.b32.xlu0 %v686, 1
  %v3314 = vpop.permute.xlu0 %3313
  %3315 = vrot.lane.b32.xlu0 %v687, 1
  %v3316 = vpop.permute.xlu0 %3315
  %3317 = vrot.lane.b32.xlu0 %v688, 1
  %v3318 = vpop.permute.xlu0 %3317
  %3319 = vrot.lane.b32.xlu0 %v689, 1
  %v3320 = vpop.permute.xlu0 %3319
  %3321 = vrot.lane.b32.xlu0 %v690, 1
  %v3322 = vpop.permute.xlu0 %3321
  %3323 = vrot.lane.b32.xlu0 %v691, 1
  %v3324 = vpop.permute.xlu0 %3323
  %3325 = vrot.lane.b32.xlu0 %v692, 1
  %v3326 = vpop.permute.xlu0 %3325
  %3327 = vrot.lane.b32.xlu0 %v693, 1
  %v3328 = vpop.permute.xlu0 %3327
  %3329 = vrot.lane.b32.xlu0 %v694, 1
  %v3330 = vpop.permute.xlu0 %3329
  %3331 = vrot.lane.b32.xlu0 %v695, 1
  %v3332 = vpop.permute.xlu0 %3331
  %3333 = vrot.lane.b32.xlu0 %v696, 1
  %v3334 = vpop.permute.xlu0 %3333
  %3335 = vrot.lane.b32.xlu0 %v697, 1
  %v3336 = vpop.permute.xlu0 %3335
  %3337 = vrot.lane.b32.xlu0 %v698, 1
  %v3338 = vpop.permute.xlu0 %3337
  %3339 = vrot.lane.b32.xlu0 %v699, 1
  %v3340 = vpop.permute.xlu0 %3339
  %3341 = vrot.lane.b32.xlu0 %v700, 1
  %v3342 = vpop.permute.xlu0 %3341
  %3343 = vrot.lane.b32.xlu0 %v701, 1
  %v3344 = vpop.permute.xlu0 %3343
  %3345 = vrot.lane.b32.xlu0 %v702, 1
  %v3346 = vpop.permute.xlu0 %3345
  %3347 = vrot.lane.b32.xlu0 %v703, 1
  %v3348 = vpop.permute.xlu0 %3347
  %3349 = vrot.lane.b32.xlu0 %v704, 1
  %v3350 = vpop.permute.xlu0 %3349
  %3351 = vrot.lane.b32.xlu0 %v705, 1
  %v3352 = vpop.permute.xlu0 %3351
  %3353 = vrot.lane.b32.xlu0 %v706, 1
  %v3354 = vpop.permute.xlu0 %3353
  %3355 = vrot.lane.b32.xlu0 %v707, 1
  %v3356 = vpop.permute.xlu0 %3355
  %3357 = vrot.lane.b32.xlu0 %v708, 1
  %v3358 = vpop.permute.xlu0 %3357
  %3359 = vrot.lane.b32.xlu0 %v709, 1
  %v3360 = vpop.permute.xlu0 %3359
  %3361 = vrot.lane.b32.xlu0 %v710, 1
  %v3362 = vpop.permute.xlu0 %3361
  %3363 = vrot.lane.b32.xlu0 %v711, 1
  %v3364 = vpop.permute.xlu0 %3363
  %3365 = vrot.lane.b32.xlu0 %v712, 1
  %v3366 = vpop.permute.xlu0 %3365
  %3367 = vrot.lane.b32.xlu0 %v713, 1
  %v3368 = vpop.permute.xlu0 %3367
  %3369 = vrot.lane.b32.xlu0 %v714, 1
  %v3370 = vpop.permute.xlu0 %3369
  %3371 = vrot.lane.b32.xlu0 %v715, 1
  %v3372 = vpop.permute.xlu0 %3371
  %3373 = vrot.lane.b32.xlu0 %v716, 1
  %v3374 = vpop.permute.xlu0 %3373
  %3375 = vrot.lane.b32.xlu0 %v717, 1
  %v3376 = vpop.permute.xlu0 %3375
  %3377 = vrot.lane.b32.xlu0 %v718, 1
  %v3378 = vpop.permute.xlu0 %3377
  %3379 = vrot.lane.b32.xlu0 %v719, 1
  %v3380 = vpop.permute.xlu0 %3379
  %3381 = vrot.lane.b32.xlu0 %v720, 1
  %v3382 = vpop.permute.xlu0 %3381
  %s3511 = scalar_lea.vmem %s4, 16
  %vm3512 = vcmask 72712
  %3513 = vst.msk [vmem:[%s3511 + $0x1] sm:$0xff] %vm3512, %v3128
  %3514 = vst.msk [vmem:[%s3511 + $0x11] sm:$0xff] %vm3512, %v3130
  %3515 = vst.msk [vmem:[%s3511 + $0x21] sm:$0xff] %vm3512, %v3132
  %3516 = vst.msk [vmem:[%s3511 + $0x31] sm:$0xff] %vm3512, %v3134
  %3517 = vst.msk [vmem:[%s3511 + $0x41] sm:$0xff] %vm3512, %v3136
  %3518 = vst.msk [vmem:[%s3511 + $0x51] sm:$0xff] %vm3512, %v3138
  %3519 = vst.msk [vmem:[%s3511 + $0x61] sm:$0xff] %vm3512, %v3140
  %3520 = vst.msk [vmem:[%s3511 + $0x71] sm:$0xff] %vm3512, %v3142
  %3521 = vst.msk [vmem:[%s3511 + $0xa1] sm:$0xff] %vm3512, %v3144
  %3522 = vst.msk [vmem:[%s3511 + $0xb1] sm:$0xff] %vm3512, %v3146
  %3523 = vst.msk [vmem:[%s3511 + $0xc1] sm:$0xff] %vm3512, %v3148
  %3524 = vst.msk [vmem:[%s3511 + $0xd1] sm:$0xff] %vm3512, %v3150
  %3525 = vst.msk [vmem:[%s3511 + $0xe1] sm:$0xff] %vm3512, %v3152
  %3526 = vst.msk [vmem:[%s3511 + $0xf1] sm:$0xff] %vm3512, %v3154
  %3527 = vst.msk [vmem:[%s3511 + $0x101] sm:$0xff] %vm3512, %v3156
  %3528 = vst.msk [vmem:[%s3511 + $0x111] sm:$0xff] %vm3512, %v3158
  %3529 = vst.msk [vmem:[%s3511 + $0x141] sm:$0xff] %vm3512, %v3160
  %3530 = vst.msk [vmem:[%s3511 + $0x151] sm:$0xff] %vm3512, %v3162
  %3531 = vst.msk [vmem:[%s3511 + $0x161] sm:$0xff] %vm3512, %v3164
  %3532 = vst.msk [vmem:[%s3511 + $0x171] sm:$0xff] %vm3512, %v3166
  %3533 = vst.msk [vmem:[%s3511 + $0x181] sm:$0xff] %vm3512, %v3168
  %3534 = vst.msk [vmem:[%s3511 + $0x191] sm:$0xff] %vm3512, %v3170
  %3535 = vst.msk [vmem:[%s3511 + $0x1a1] sm:$0xff] %vm3512, %v3172
  %3536 = vst.msk [vmem:[%s3511 + $0x1b1] sm:$0xff] %vm3512, %v3174
  %3537 = vst.msk [vmem:[%s3511 + $0x1e1] sm:$0xff] %vm3512, %v3176
  %3538 = vst.msk [vmem:[%s3511 + $0x1f1] sm:$0xff] %vm3512, %v3178
  %3539 = vst.msk [vmem:[%s3511 + $0x201] sm:$0xff] %vm3512, %v3180
  %3540 = vst.msk [vmem:[%s3511 + $0x211] sm:$0xff] %vm3512, %v3182
  %3541 = vst.msk [vmem:[%s3511 + $0x221] sm:$0xff] %vm3512, %v3184
  %3542 = vst.msk [vmem:[%s3511 + $0x231] sm:$0xff] %vm3512, %v3186
  %3543 = vst.msk [vmem:[%s3511 + $0x241] sm:$0xff] %vm3512, %v3188
  %3544 = vst.msk [vmem:[%s3511 + $0x251] sm:$0xff] %vm3512, %v3190
  %3545 = vst.msk [vmem:[%s3511 + $0x281] sm:$0xff] %vm3512, %v3192
  %3546 = vst.msk [vmem:[%s3511 + $0x291] sm:$0xff] %vm3512, %v3194
  %3547 = vst.msk [vmem:[%s3511 + $0x2a1] sm:$0xff] %vm3512, %v3196
  %3548 = vst.msk [vmem:[%s3511 + $0x2b1] sm:$0xff] %vm3512, %v3198
  %3549 = vst.msk [vmem:[%s3511 + $0x2c1] sm:$0xff] %vm3512, %v3200
  %3550 = vst.msk [vmem:[%s3511 + $0x2d1] sm:$0xff] %vm3512, %v3202
  %3551 = vst.msk [vmem:[%s3511 + $0x2e1] sm:$0xff] %vm3512, %v3204
  %3552 = vst.msk [vmem:[%s3511 + $0x2f1] sm:$0xff] %vm3512, %v3206
  %3553 = vst.msk [vmem:[%s3511 + $0x321] sm:$0xff] %vm3512, %v3208
  %3554 = vst.msk [vmem:[%s3511 + $0x331] sm:$0xff] %vm3512, %v3210
  %3555 = vst.msk [vmem:[%s3511 + $0x341] sm:$0xff] %vm3512, %v3212
  %3556 = vst.msk [vmem:[%s3511 + $0x351] sm:$0xff] %vm3512, %v3214
  %3557 = vst.msk [vmem:[%s3511 + $0x361] sm:$0xff] %vm3512, %v3216
  %3558 = vst.msk [vmem:[%s3511 + $0x371] sm:$0xff] %vm3512, %v3218
  %3559 = vst.msk [vmem:[%s3511 + $0x381] sm:$0xff] %vm3512, %v3220
  %3560 = vst.msk [vmem:[%s3511 + $0x391] sm:$0xff] %vm3512, %v3222
  %3561 = vst.msk [vmem:[%s3511 + $0x3c1] sm:$0xff] %vm3512, %v3224
  %3562 = vst.msk [vmem:[%s3511 + $0x3d1] sm:$0xff] %vm3512, %v3226
  %3563 = vst.msk [vmem:[%s3511 + $0x3e1] sm:$0xff] %vm3512, %v3228
  %3564 = vst.msk [vmem:[%s3511 + $0x3f1] sm:$0xff] %vm3512, %v3230
  %3565 = vst.msk [vmem:[%s3511 + $0x401] sm:$0xff] %vm3512, %v3232
  %3566 = vst.msk [vmem:[%s3511 + $0x411] sm:$0xff] %vm3512, %v3234
  %3567 = vst.msk [vmem:[%s3511 + $0x421] sm:$0xff] %vm3512, %v3236
  %3568 = vst.msk [vmem:[%s3511 + $0x431] sm:$0xff] %vm3512, %v3238
  %3569 = vst.msk [vmem:[%s3511 + $0x461] sm:$0xff] %vm3512, %v3240
  %3570 = vst.msk [vmem:[%s3511 + $0x471] sm:$0xff] %vm3512, %v3242
  %3571 = vst.msk [vmem:[%s3511 + $0x481] sm:$0xff] %vm3512, %v3244
  %3572 = vst.msk [vmem:[%s3511 + $0x491] sm:$0xff] %vm3512, %v3246
  %3573 = vst.msk [vmem:[%s3511 + $0x4a1] sm:$0xff] %vm3512, %v3248
  %3574 = vst.msk [vmem:[%s3511 + $0x4b1] sm:$0xff] %vm3512, %v3250
  %3575 = vst.msk [vmem:[%s3511 + $0x4c1] sm:$0xff] %vm3512, %v3252
  %3576 = vst.msk [vmem:[%s3511 + $0x4d1] sm:$0xff] %vm3512, %v3254
  %3577 = vst.msk [vmem:[%s3511 + $0x501] sm:$0xff] %vm3512, %v3256
  %3578 = vst.msk [vmem:[%s3511 + $0x511] sm:$0xff] %vm3512, %v3258
  %3579 = vst.msk [vmem:[%s3511 + $0x521] sm:$0xff] %vm3512, %v3260
  %3580 = vst.msk [vmem:[%s3511 + $0x531] sm:$0xff] %vm3512, %v3262
  %3581 = vst.msk [vmem:[%s3511 + $0x541] sm:$0xff] %vm3512, %v3264
  %3582 = vst.msk [vmem:[%s3511 + $0x551] sm:$0xff] %vm3512, %v3266
  %3583 = vst.msk [vmem:[%s3511 + $0x561] sm:$0xff] %vm3512, %v3268
  %3584 = vst.msk [vmem:[%s3511 + $0x571] sm:$0xff] %vm3512, %v3270
  %3585 = vst.msk [vmem:[%s3511 + $0x5a1] sm:$0xff] %vm3512, %v3272
  %3586 = vst.msk [vmem:[%s3511 + $0x5b1] sm:$0xff] %vm3512, %v3274
  %3587 = vst.msk [vmem:[%s3511 + $0x5c1] sm:$0xff] %vm3512, %v3276
  %3588 = vst.msk [vmem:[%s3511 + $0x5d1] sm:$0xff] %vm3512, %v3278
  %3589 = vst.msk [vmem:[%s3511 + $0x5e1] sm:$0xff] %vm3512, %v3280
  %3590 = vst.msk [vmem:[%s3511 + $0x5f1] sm:$0xff] %vm3512, %v3282
  %3591 = vst.msk [vmem:[%s3511 + $0x601] sm:$0xff] %vm3512, %v3284
  %3592 = vst.msk [vmem:[%s3511 + $0x611] sm:$0xff] %vm3512, %v3286
  %3593 = vst.msk [vmem:[%s3511 + $0x641] sm:$0xff] %vm3512, %v3288
  %3594 = vst.msk [vmem:[%s3511 + $0x651] sm:$0xff] %vm3512, %v3290
  %3595 = vst.msk [vmem:[%s3511 + $0x661] sm:$0xff] %vm3512, %v3292
  %3596 = vst.msk [vmem:[%s3511 + $0x671] sm:$0xff] %vm3512, %v3294
  %3597 = vst.msk [vmem:[%s3511 + $0x681] sm:$0xff] %vm3512, %v3296
  %3598 = vst.msk [vmem:[%s3511 + $0x691] sm:$0xff] %vm3512, %v3298
  %3599 = vst.msk [vmem:[%s3511 + $0x6a1] sm:$0xff] %vm3512, %v3300
  %3600 = vst.msk [vmem:[%s3511 + $0x6b1] sm:$0xff] %vm3512, %v3302
  %3601 = vst.msk [vmem:[%s3511 + $0x6e1] sm:$0xff] %vm3512, %v3304
  %3602 = vst.msk [vmem:[%s3511 + $0x6f1] sm:$0xff] %vm3512, %v3306
  %3603 = vst.msk [vmem:[%s3511 + $0x701] sm:$0xff] %vm3512, %v3308
  %3604 = vst.msk [vmem:[%s3511 + $0x711] sm:$0xff] %vm3512, %v3310
  %3605 = vst.msk [vmem:[%s3511 + $0x721] sm:$0xff] %vm3512, %v3312
  %3606 = vst.msk [vmem:[%s3511 + $0x731] sm:$0xff] %vm3512, %v3314
  %3607 = vst.msk [vmem:[%s3511 + $0x741] sm:$0xff] %vm3512, %v3316
  %3608 = vst.msk [vmem:[%s3511 + $0x751] sm:$0xff] %vm3512, %v3318
  %3609 = vst.msk [vmem:[%s3511 + $0x781] sm:$0xff] %vm3512, %v3320
  %3610 = vst.msk [vmem:[%s3511 + $0x791] sm:$0xff] %vm3512, %v3322
  %3611 = vst.msk [vmem:[%s3511 + $0x7a1] sm:$0xff] %vm3512, %v3324
  %3612 = vst.msk [vmem:[%s3511 + $0x7b1] sm:$0xff] %vm3512, %v3326
  %3613 = vst.msk [vmem:[%s3511 + $0x7c1] sm:$0xff] %vm3512, %v3328
  %3614 = vst.msk [vmem:[%s3511 + $0x7d1] sm:$0xff] %vm3512, %v3330
  %3615 = vst.msk [vmem:[%s3511 + $0x7e1] sm:$0xff] %vm3512, %v3332
  %3616 = vst.msk [vmem:[%s3511 + $0x7f1] sm:$0xff] %vm3512, %v3334
  %3617 = vst.msk [vmem:[%s3511 + $0x821] sm:$0xff] %vm3512, %v3336
  %3618 = vst.msk [vmem:[%s3511 + $0x831] sm:$0xff] %vm3512, %v3338
  %3619 = vst.msk [vmem:[%s3511 + $0x841] sm:$0xff] %vm3512, %v3340
  %3620 = vst.msk [vmem:[%s3511 + $0x851] sm:$0xff] %vm3512, %v3342
  %3621 = vst.msk [vmem:[%s3511 + $0x861] sm:$0xff] %vm3512, %v3344
  %3622 = vst.msk [vmem:[%s3511 + $0x871] sm:$0xff] %vm3512, %v3346
  %3623 = vst.msk [vmem:[%s3511 + $0x881] sm:$0xff] %vm3512, %v3348
  %3624 = vst.msk [vmem:[%s3511 + $0x891] sm:$0xff] %vm3512, %v3350
  %3625 = vst.msk [vmem:[%s3511 + $0x8c1] sm:$0xff] %vm3512, %v3352
  %3626 = vst.msk [vmem:[%s3511 + $0x8d1] sm:$0xff] %vm3512, %v3354
  %3627 = vst.msk [vmem:[%s3511 + $0x8e1] sm:$0xff] %vm3512, %v3356
  %3628 = vst.msk [vmem:[%s3511 + $0x8f1] sm:$0xff] %vm3512, %v3358
  %3629 = vst.msk [vmem:[%s3511 + $0x901] sm:$0xff] %vm3512, %v3360
  %3630 = vst.msk [vmem:[%s3511 + $0x911] sm:$0xff] %vm3512, %v3362
  %3631 = vst.msk [vmem:[%s3511 + $0x921] sm:$0xff] %vm3512, %v3364
  %3632 = vst.msk [vmem:[%s3511 + $0x931] sm:$0xff] %vm3512, %v3366
  %3633 = vst.msk [vmem:[%s3511 + $0x961] sm:$0xff] %vm3512, %v3368
  %3634 = vst.msk [vmem:[%s3511 + $0x971] sm:$0xff] %vm3512, %v3370
  %3635 = vst.msk [vmem:[%s3511 + $0x981] sm:$0xff] %vm3512, %v3372
  %3636 = vst.msk [vmem:[%s3511 + $0x991] sm:$0xff] %vm3512, %v3374
  %3637 = vst.msk [vmem:[%s3511 + $0x9a1] sm:$0xff] %vm3512, %v3376
  %3638 = vst.msk [vmem:[%s3511 + $0x9b1] sm:$0xff] %vm3512, %v3378
  %3639 = vst.msk [vmem:[%s3511 + $0x9c1] sm:$0xff] %vm3512, %v3380
  %3640 = vst.msk [vmem:[%s3511 + $0x9d1] sm:$0xff] %vm3512, %v3382
  // Predicated region
  $region18: #{tpu_custom_call.1} parent=0 // pred_check
    _
  $region19: #{tpu_custom_call.1} parent=0 // pred_check_branch
    %3642 = sbr.rel (0) target = $region21
  $region20: #{tpu_custom_call.1} parent=0 // pred_region
    _
  $region21: #{tpu_custom_call.1} parent=0 // pred_fallthru
    _
  // Predicated region
  $region22: #{tpu_custom_call.1} parent=0 // pred_check
    _
  $region23: #{tpu_custom_call.1} parent=0 // pred_check_branch
    %3644 = sbr.rel (0) target = $region25
  $region24: #{tpu_custom_call.1} parent=0 // pred_region
    _
  $region25: #{tpu_custom_call.1} parent=0 // pred_fallthru
    _

</llo_original>
